<compile_context>
chip_gen: v5e
topology: v5e:2x2
jax: 0.10.0
libtpu: 0.0.40
codegen_flags: <defaults>
</compile_context>

<pallas_src>
import functools
import math

import jax
import jax.numpy as jnp
from jax.experimental import pallas as pl
from jax.experimental.pallas import tpu as pltpu


# ----------------------------- in-kernel math ------------------------------

def _erf(x):
    # Abramowitz & Stegun 7.1.26; approx EUP reciprocal + one Newton step
    # keeps ~f32 accuracy (addresses the review's accuracy concern) while the
    # divide stays off the VALU.
    p = 0.3275911
    a1, a2, a3, a4, a5 = (0.254829592, -0.284496736, 1.421413741,
                          -1.453152027, 1.061405429)
    s = jnp.where(x >= 0.0, 1.0, -1.0)
    z = jnp.abs(x)
    y = 1.0 + p * z
    t = pl.reciprocal(y, approx=True)
    t = t * (2.0 - y * t)                       # Newton step
    poly = ((((a5 * t + a4) * t + a3) * t + a2) * t + a1) * t
    return s * (1.0 - poly * jnp.exp(-z * z))


def _gelu_exact(x):
    # torch.nn.GELU() default = exact erf-based GELU.
    return 0.5 * x * (1.0 + _erf(x * (1.0 / math.sqrt(2.0))))


def _layernorm(x, gamma, beta, eps=1e-5):
    mu = jnp.mean(x, axis=-1, keepdims=True)
    var = jnp.mean(jnp.square(x - mu), axis=-1, keepdims=True)
    return (x - mu) * jax.lax.rsqrt(var + eps) * gamma + beta


def _mm(a_bf16, w_bf16):
    # Plain (M,K)@(K,N): weights are pre-transposed to (in, out) on the host,
    # both operands bf16, f32 accumulation on the MXU.
    return jnp.dot(a_bf16, w_bf16, preferred_element_type=jnp.float32)


# --------------------------------- kernel ----------------------------------

def encoder_layers_kernel(x_ref, mask_ref, wqkv_ref, worf_ref, wfc_ref,
                          wff1_ref, wff2_ref, ps_ref, bff1_ref,
                          o_ref, *, batch_tile, seq, heads, depth, n_features):
    l = pl.program_id(1)                      # layer index ("arbitrary" axis)

    # Layer 0 (for this batch tile): seed the resident activation.  o_ref's
    # block index is constant over the layer axis, so it stays in VMEM and
    # carries the activation across all layers.
    @pl.when(l == 0)
    def _():
        o_ref[...] = x_ref[...]

    E = heads * depth
    HF = heads * n_features
    R = batch_tile * seq

    x = o_ref[...]                            # (R, E) f32
    xb = x.astype(jnp.bfloat16)

    # ---- packed small params (one DMA) -----------------------------------
    ps = ps_ref[0]                            # (9, E) f32
    bq, bk, bv = ps[0:1], ps[1:2], ps[2:3]
    bfc, b2 = ps[3:4], ps[4:5]
    g1, be1, g2, be2 = ps[5:6], ps[6:7], ps[7:8], ps[8:9]
    b1 = bff1_ref[0]                          # (1, E*fe) f32

    wqkv = wqkv_ref[0]                        # (3E, E)  bf16, block-diag/head
    worf = worf_ref[0]                        # (2E, HF) bf16, c folded in
    mask = mask_ref[...]                      # (HF, E)  bf16, diag head blocks

    # ---- FastAttention: lane-dense projections (no head split/merge) ------
    q = _mm(xb, wqkv[0:E]) + bq               # (R, E) f32
    k = _mm(xb, wqkv[E:2 * E]) + bk
    v = _mm(xb, wqkv[2 * E:3 * E]) + bv

    # kernel_function: relu(((Wx+b) * D^-0.25) @ ORF^T) + 1e-3  (scale folded)
    qf = jnp.maximum(_mm(q.astype(jnp.bfloat16), worf[0:E]), 0.0) + 0.001
    kf = jnp.maximum(_mm(k.astype(jnp.bfloat16), worf[E:2 * E]), 0.0) + 0.001

    qf3 = qf.reshape(batch_tile, seq, HF)     # leading-dim split only
    kf3 = kf.reshape(batch_tile, seq, HF)
    v3 = v.reshape(batch_tile, seq, E)

    # bidirectional (non-causal) linear attention; head separation is done by
    # the block-diagonal mask, keeping every contraction 3-D with one leading
    # batch axis (no 4-D transposes).
    kt_i = jnp.sum(kf3, axis=1, keepdims=True)                 # (b, 1, HF)
    qkt = (qf3 * kt_i).reshape(R, HF)
    denom = _mm(qkt.astype(jnp.bfloat16), mask)                # (R, E) per-head
    norm = pl.reciprocal(denom, approx=True)                   # safe: +1e-3 offset

    kv = jnp.einsum('bsf,bsd->bfd',
                    kf3.astype(jnp.bfloat16), v3.astype(jnp.bfloat16),
                    preferred_element_type=jnp.float32)        # (b, HF, E)
    kv = (kv * mask.astype(jnp.float32)).astype(jnp.bfloat16)  # keep diag blocks
    att = jnp.einsum('bsf,bfd->bsd',
                     qf3.astype(jnp.bfloat16), kv,
                     preferred_element_type=jnp.float32)       # (b, S, E)
    att2 = att.reshape(R, E) * norm                            # merge heads

    att_out = _mm(att2.astype(jnp.bfloat16), wfc_ref[0]) + bfc  # (R, E)

    # ---- residual + LayerNorm + GELU FFN + residual + LayerNorm -----------
    add = att_out + x
    reg = _layernorm(add, g1, be1)

    # TODO(synk): for very large E*fe (v7x 64 MiB VMEM) block the FFN hidden
    # dim with an extra grid axis / in-kernel loop instead of whole w1/w2.
    h1 = _gelu_exact(_mm(reg.astype(jnp.bfloat16), wff1_ref[0]) + b1)
    h1b = h1.astype(jnp.bfloat16)             # bf16-resident large intermediate
    ffn = _mm(h1b, wff2_ref[0]) + b2
    out = _layernorm(ffn + reg, g2, be2)

    o_ref[...] = out.astype(o_ref.dtype)


# -------------------------------- wrapper ----------------------------------

def performer_encoder_layers(x, layers, heads, batch_tiles=1):
    """Run all PerformerBlocks in a single pallas_call. x: (B, S, E) float32."""
    B, S, E = x.shape
    L = len(layers)
    depth = E // heads
    F = layers[0]['orf_q'].shape[0]
    HF = heads * F
    hidden = layers[0]['w1'].shape[0]          # E * forward_expansion

    # Batch-parallel grid axis (use a multiple of 2 tiles on v7x to feed both
    # TensorCores; 1 tile is weight-DMA friendliest on v5e/v6e).
    if batch_tiles < 1 or B % batch_tiles != 0:
        batch_tiles = 1
    if batch_tiles > 1 and ((B // batch_tiles) * S) % 8 != 0:
        batch_tiles = 1
    tb = B // batch_tiles
    r_tile = tb * S

    c = float(depth) ** -0.25
    eye_h = jnp.eye(heads, dtype=jnp.float32)

    def bd(w):                                  # per-head block-diag, (in, out)
        return jnp.kron(eye_h, w.T)

    w_qkv, w_orf, w_fc, w_ff1, w_ff2, p_small, b_ff1 = [], [], [], [], [], [], []
    for lp in layers:
        w_qkv.append(jnp.concatenate(
            [bd(lp['wq']), bd(lp['wk']), bd(lp['wv'])], axis=0))      # (3E, E)
        w_orf.append(jnp.concatenate(
            [jnp.kron(eye_h, (c * lp['orf_q']).T),
             jnp.kron(eye_h, (c * lp['orf_k']).T)], axis=0))          # (2E, HF)
        w_fc.append(lp['wfc'].T)                                      # (E, E)
        w_ff1.append(lp['w1'].T)                                      # (E, E*fe)
        w_ff2.append(lp['w2'].T)                                      # (E*fe, E)
        p_small.append(jnp.stack([
            jnp.tile(lp['bq'].reshape(-1), heads),
            jnp.tile(lp['bk'].reshape(-1), heads),
            jnp.tile(lp['bv'].reshape(-1), heads),
            lp['bfc'].reshape(-1),
            lp['b2'].reshape(-1),
            lp['ln1_g'].reshape(-1),
            lp['ln1_b'].reshape(-1),
            lp['ln2_g'].reshape(-1),
            lp['ln2_b'].reshape(-1)], axis=0))                        # (9, E)
        b_ff1.append(lp['b1'].reshape(1, -1))                         # (1, E*fe)

    # Matmul weights shipped as bf16 (half DMA / VMEM); everything else f32.
    w_qkv = jnp.stack(w_qkv).astype(jnp.bfloat16)     # (L, 3E, E)
    w_orf = jnp.stack(w_orf).astype(jnp.bfloat16)     # (L, 2E, HF)
    w_fc = jnp.stack(w_fc).astype(jnp.bfloat16)       # (L, E, E)
    w_ff1 = jnp.stack(w_ff1).astype(jnp.bfloat16)     # (L, E, E*fe)
    w_ff2 = jnp.stack(w_ff2).astype(jnp.bfloat16)     # (L, E*fe, E)
    p_small = jnp.stack(p_small).astype(jnp.float32)  # (L, 9, E)
    b_ff1 = jnp.stack(b_ff1).astype(jnp.float32)      # (L, 1, E*fe)

    # Block-diagonal {0,1} head mask: kv block selection + per-head denom.
    # NOTE: F is not zero-padded to 128 here because of the +1e-3 feature
    # offset (padding would need an extra feature mask to stay exact).
    head_mask = jnp.kron(eye_h, jnp.ones((F, depth), jnp.float32)
                         ).astype(jnp.bfloat16)       # (HF, E)

    x2 = x.reshape(B * S, E).astype(jnp.float32)

    grid = (batch_tiles, L)
    in_specs = [
        pl.BlockSpec((r_tile, E), lambda b, l: (b, 0)),              # x
        pl.BlockSpec((HF, E), lambda b, l: (0, 0)),                  # head mask
        pl.BlockSpec((1, 3 * E, E), lambda b, l: (l, 0, 0)),         # qkv
        pl.BlockSpec((1, 2 * E, HF), lambda b, l: (l, 0, 0)),        # orf
        pl.BlockSpec((1, E, E), lambda b, l: (l, 0, 0)),             # fc
        pl.BlockSpec((1, E, hidden), lambda b, l: (l, 0, 0)),        # ffn w1
        pl.BlockSpec((1, hidden, E), lambda b, l: (l, 0, 0)),        # ffn w2
        pl.BlockSpec((1, 9, E), lambda b, l: (l, 0, 0)),             # small pack
        pl.BlockSpec((1, 1, hidden), lambda b, l: (l, 0, 0)),        # ffn b1
    ]
    out_spec = pl.BlockSpec((r_tile, E), lambda b, l: (b, 0))

    # Explicit scoped-VMEM budget derived from the per-core capacity
    # (re-derives automatically for v5e/v6e 128 MiB vs. v7x 64 MiB).
    vmem_limit = None
    try:
        cap = int(pltpu.get_tpu_info().vmem_capacity_bytes)
        vmem_limit = int(cap * 0.85)
    except Exception:
        vmem_limit = None

    out = pl.pallas_call(
        functools.partial(encoder_layers_kernel, batch_tile=tb, seq=S,
                          heads=heads, depth=depth, n_features=F),
        out_shape=jax.ShapeDtypeStruct((B * S, E), x2.dtype),
        grid=grid,
        in_specs=in_specs,
        out_specs=out_spec,
        compiler_params=pltpu.CompilerParams(
            dimension_semantics=("parallel", "arbitrary"),
            vmem_limit_bytes=vmem_limit),
    )(x2, head_mask, w_qkv, w_orf, w_fc, w_ff1, w_ff2, p_small, b_ff1)
    return out.reshape(B, S, E)


def encoder_forward(tokens, params, heads, batch_tiles=1):
    # Embedding gather + positional embedding are glue (plain JAX).
    emb = params['embedding'][tokens]                      # (B, S, E)
    pos = params['pos_emb'][:, :tokens.shape[1], :]
    out = emb + pos                                        # dropout == identity
    return performer_encoder_layers(out, params['layers'], heads,
                                    batch_tiles=batch_tiles)


# --------------------------- parameter creation ----------------------------

def init_params(key, vocab_size, E, num_layers, heads, n_features,
                forward_expansion, max_len):
    depth = E // heads
    F = n_features
    keys = jax.random.split(key, 1 + num_layers)

    def orf(k):
        # Orthogonal random features: QR of uniform blocks, rows scaled by
        # gaussian row norms (same construction as the reference).
        k1, k2 = jax.random.split(k)
        n, rem = F // depth, F % depth
        ks = jax.random.split(k1, n + 1)
        blocks = []
        for i in range(n):
            m = jax.random.uniform(ks[i], (depth, depth), jnp.float32)
            q_mat, _ = jnp.linalg.qr(m)
            blocks.append(q_mat)
        if rem > 0:
            m = jax.random.uniform(ks[n], (depth, depth), jnp.float32)
            q_mat, _ = jnp.linalg.qr(m)
            blocks.append(q_mat[:rem])
        feats = jnp.concatenate(blocks, axis=0)            # (F, depth)
        mult = jnp.linalg.norm(
            jax.random.normal(k2, (F, depth), jnp.float32), axis=1)
        return mult[:, None] * feats

    def linear(k, out_f, in_f):
        k1, k2 = jax.random.split(k)
        bound = 1.0 / math.sqrt(in_f)
        w = jax.random.uniform(k1, (out_f, in_f), jnp.float32, -bound, bound)
        b = jax.random.uniform(k2, (1, out_f), jnp.float32, -bound, bound)
        return w, b

    params = {
        'embedding': jax.random.normal(keys[0], (vocab_size, E), jnp.float32) * 0.02,
        'pos_emb': jnp.zeros((1, max_len, E), jnp.float32),   # torch.zeros init
        'layers': [],
    }
    for li in range(num_layers):
        lk = jax.random.split(keys[1 + li], 8)
        wq, bq = linear(lk[0], depth, depth)
        wk, bk = linear(lk[1], depth, depth)
        wv, bv = linear(lk[2], depth, depth)
        wfc, bfc = linear(lk[3], E, depth * heads)
        w1, b1 = linear(lk[4], E * forward_expansion, E)
        w2, b2 = linear(lk[5], E, E * forward_expansion)
        params['layers'].append(dict(
            wq=wq, bq=bq, wk=wk, bk=bk, wv=wv, bv=bv,
            orf_q=orf(lk[6]), orf_k=orf(lk[7]),
            wfc=wfc, bfc=bfc,
            ln1_g=jnp.ones((1, E), jnp.float32),
            ln1_b=jnp.zeros((1, E), jnp.float32),
            w1=w1, b1=b1, w2=w2, b2=b2,
            ln2_g=jnp.ones((1, E), jnp.float32),
            ln2_b=jnp.zeros((1, E), jnp.float32),
        ))
    return params


if __name__ == "__main__":
    vocab_size = 50
    embedding_out = 32
    num_layers = 2
    heads = 2
    n_features = 16
    forward_expansion = 2
    max_len = 16
    B, S = 2, 8

    key = jax.random.PRNGKey(0)
    pkey, tkey = jax.random.split(key)
    params = init_params(pkey, vocab_size, embedding_out, num_layers, heads,
                         n_features, forward_expansion, max_len)
    tokens = jax.random.randint(tkey, (B, S), 0, vocab_size, dtype=jnp.int32)

    # mask is a no-op in the reference forward (non-inplace masked_fill), so it
    # is intentionally not threaded through. batch_tiles=2 exercises the
    # batch-parallel grid axis (feeds both TensorCores on v7x).
    out = encoder_forward(tokens, params, heads, batch_tiles=2)
    jax.block_until_ready(out)
    assert out.shape == (B, S, embedding_out)
    assert bool(jnp.all(jnp.isfinite(out)))
    print("KERNEL_OK")
</pallas_src>

<mosaic_0001>
module attributes {stable_mosaic.version = 11 : i64} {
  func.func @encoder_layers_kernel(%arg0: i32, %arg1: i32, %arg2: memref<8x32xf32, #tpu.memory_space<vmem>>, %arg3: memref<32x32xbf16, #tpu.memory_space<vmem>>, %arg4: memref<1x96x32xbf16, #tpu.memory_space<vmem>>, %arg5: memref<1x64x32xbf16, #tpu.memory_space<vmem>>, %arg6: memref<1x32x32xbf16, #tpu.memory_space<vmem>>, %arg7: memref<1x32x64xbf16, #tpu.memory_space<vmem>>, %arg8: memref<1x64x32xbf16, #tpu.memory_space<vmem>>, %arg9: memref<1x9x32xf32, #tpu.memory_space<vmem>>, %arg10: memref<1x1x64xf32, #tpu.memory_space<vmem>>, %arg11: memref<8x32xf32, #tpu.memory_space<vmem>>) attributes {dimension_semantics = [#tpu.dimension_semantics<parallel>, #tpu.dimension_semantics<arbitrary>], iteration_bounds = array<i64: 2, 2>, scalar_prefetch = 0 : i64, scratch_operands = 0 : i64, tpu.core_type = #tpu.core_type<tc>, window_params = [{transform_indices = @transform_0, window_bounds = array<i64: 8, 32>}, {pipeline_mode = #tpu.pipeline_mode<synchronous>, transform_indices = @transform_1, window_bounds = array<i64: 32, 32>}, {transform_indices = @transform_2, window_bounds = array<i64: 1, 96, 32>}, {transform_indices = @transform_3, window_bounds = array<i64: 1, 64, 32>}, {transform_indices = @transform_4, window_bounds = array<i64: 1, 32, 32>}, {transform_indices = @transform_5, window_bounds = array<i64: 1, 32, 64>}, {transform_indices = @transform_6, window_bounds = array<i64: 1, 64, 32>}, {transform_indices = @transform_7, window_bounds = array<i64: 1, 9, 32>}, {transform_indices = @transform_8, window_bounds = array<i64: 1, 1, 64>}, {transform_indices = @transform_9, window_bounds = array<i64: 8, 32>}]} {
    %c0_i32 = arith.constant 0 : i32
    %0 = arith.cmpi eq, %arg1, %c0_i32 : i32
    %1 = arith.extui %0 : i1 to i32
    %c0_i32_0 = arith.constant 0 : i32
    %2 = arith.cmpi ne, %1, %c0_i32_0 : i32
    scf.if %2 {
      %c0_68 = arith.constant 0 : index
      %c0_69 = arith.constant 0 : index
      %180 = vector.load %arg2[%c0_68, %c0_69] : memref<8x32xf32, #tpu.memory_space<vmem>>, vector<8x32xf32>
      %c0_70 = arith.constant 0 : index
      %c0_71 = arith.constant 0 : index
      %181 = vector.load %arg11[%c0_70, %c0_71] : memref<8x32xf32, #tpu.memory_space<vmem>>, vector<8x32xf32>
      tpu.vector_store %arg11[%c0_70, %c0_71], %180 {strides = array<i32>} : memref<8x32xf32, #tpu.memory_space<vmem>>, vector<8x32xf32>,
    } else {
    }
    %c0 = arith.constant 0 : index
    %c0_1 = arith.constant 0 : index
    %3 = vector.load %arg11[%c0, %c0_1] : memref<8x32xf32, #tpu.memory_space<vmem>>, vector<8x32xf32>
    %4 = arith.truncf %3 : vector<8x32xf32> to vector<8x32xbf16>
    %c0_2 = arith.constant 0 : index
    %c0_3 = arith.constant 0 : index
    %c0_4 = arith.constant 0 : index
    %5 = vector.load %arg9[%c0_2, %c0_3, %c0_4] : memref<1x9x32xf32, #tpu.memory_space<vmem>>, vector<1x9x32xf32>
    %6 = vector.shape_cast %5 : vector<1x9x32xf32> to vector<9x32xf32>
    %7 = vector.extract_strided_slice %6 {offsets = [0, 0], sizes = [1, 32], strides = [1, 1]} : vector<9x32xf32> to vector<1x32xf32>
    %8 = vector.extract_strided_slice %6 {offsets = [1, 0], sizes = [1, 32], strides = [1, 1]} : vector<9x32xf32> to vector<1x32xf32>
    %9 = vector.extract_strided_slice %6 {offsets = [2, 0], sizes = [1, 32], strides = [1, 1]} : vector<9x32xf32> to vector<1x32xf32>
    %10 = vector.extract_strided_slice %6 {offsets = [3, 0], sizes = [1, 32], strides = [1, 1]} : vector<9x32xf32> to vector<1x32xf32>
    %11 = vector.extract_strided_slice %6 {offsets = [4, 0], sizes = [1, 32], strides = [1, 1]} : vector<9x32xf32> to vector<1x32xf32>
    %12 = vector.extract_strided_slice %6 {offsets = [5, 0], sizes = [1, 32], strides = [1, 1]} : vector<9x32xf32> to vector<1x32xf32>
    %13 = vector.extract_strided_slice %6 {offsets = [6, 0], sizes = [1, 32], strides = [1, 1]} : vector<9x32xf32> to vector<1x32xf32>
    %14 = vector.extract_strided_slice %6 {offsets = [7, 0], sizes = [1, 32], strides = [1, 1]} : vector<9x32xf32> to vector<1x32xf32>
    %15 = vector.extract_strided_slice %6 {offsets = [8, 0], sizes = [1, 32], strides = [1, 1]} : vector<9x32xf32> to vector<1x32xf32>
    %c0_5 = arith.constant 0 : index
    %c0_6 = arith.constant 0 : index
    %c0_7 = arith.constant 0 : index
    %16 = vector.load %arg10[%c0_5, %c0_6, %c0_7] : memref<1x1x64xf32, #tpu.memory_space<vmem>>, vector<1x1x64xf32>
    %17 = vector.shape_cast %16 : vector<1x1x64xf32> to vector<1x64xf32>
    %c0_8 = arith.constant 0 : index
    %c0_9 = arith.constant 0 : index
    %c0_10 = arith.constant 0 : index
    %18 = vector.load %arg4[%c0_8, %c0_9, %c0_10] : memref<1x96x32xbf16, #tpu.memory_space<vmem>>, vector<1x96x32xbf16>
    %19 = vector.shape_cast %18 : vector<1x96x32xbf16> to vector<96x32xbf16>
    %c0_11 = arith.constant 0 : index
    %c0_12 = arith.constant 0 : index
    %c0_13 = arith.constant 0 : index
    %20 = vector.load %arg5[%c0_11, %c0_12, %c0_13] : memref<1x64x32xbf16, #tpu.memory_space<vmem>>, vector<1x64x32xbf16>
    %21 = vector.shape_cast %20 : vector<1x64x32xbf16> to vector<64x32xbf16>
    %c0_14 = arith.constant 0 : index
    %c0_15 = arith.constant 0 : index
    %22 = vector.load %arg3[%c0_14, %c0_15] : memref<32x32xbf16, #tpu.memory_space<vmem>>, vector<32x32xbf16>
    %23 = vector.extract_strided_slice %19 {offsets = [0, 0], sizes = [32, 32], strides = [1, 1]} : vector<96x32xbf16> to vector<32x32xbf16>
    %cst = arith.constant dense<0.000000e+00> : vector<8x32xf32>
    %24 = tpu.matmul %4, %23, %cst {dimension_numbers = #tpu.dot_dimension_numbers<[1], [0], [0], [1], [0, 0, 1, 1], [], []>} : vector<8x32xbf16>, vector<32x32xbf16>, vector<8x32xf32> -> vector<8x32xf32>
    %25 = vector.broadcast %7 : vector<1x32xf32> to vector<8x32xf32>
    %26 = arith.addf %24, %25 : vector<8x32xf32>
    %27 = vector.extract_strided_slice %19 {offsets = [32, 0], sizes = [32, 32], strides = [1, 1]} : vector<96x32xbf16> to vector<32x32xbf16>
    %cst_16 = arith.constant dense<0.000000e+00> : vector<8x32xf32>
    %28 = tpu.matmul %4, %27, %cst_16 {dimension_numbers = #tpu.dot_dimension_numbers<[1], [0], [0], [1], [0, 0, 1, 1], [], []>} : vector<8x32xbf16>, vector<32x32xbf16>, vector<8x32xf32> -> vector<8x32xf32>
    %29 = vector.broadcast %8 : vector<1x32xf32> to vector<8x32xf32>
    %30 = arith.addf %28, %29 : vector<8x32xf32>
    %31 = vector.extract_strided_slice %19 {offsets = [64, 0], sizes = [32, 32], strides = [1, 1]} : vector<96x32xbf16> to vector<32x32xbf16>
    %cst_17 = arith.constant dense<0.000000e+00> : vector<8x32xf32>
    %32 = tpu.matmul %4, %31, %cst_17 {dimension_numbers = #tpu.dot_dimension_numbers<[1], [0], [0], [1], [0, 0, 1, 1], [], []>} : vector<8x32xbf16>, vector<32x32xbf16>, vector<8x32xf32> -> vector<8x32xf32>
    %33 = vector.broadcast %9 : vector<1x32xf32> to vector<8x32xf32>
    %34 = arith.addf %32, %33 : vector<8x32xf32>
    %35 = arith.truncf %26 : vector<8x32xf32> to vector<8x32xbf16>
    %36 = vector.extract_strided_slice %21 {offsets = [0, 0], sizes = [32, 32], strides = [1, 1]} : vector<64x32xbf16> to vector<32x32xbf16>
    %cst_18 = arith.constant dense<0.000000e+00> : vector<8x32xf32>
    %37 = tpu.matmul %35, %36, %cst_18 {dimension_numbers = #tpu.dot_dimension_numbers<[1], [0], [0], [1], [0, 0, 1, 1], [], []>} : vector<8x32xbf16>, vector<32x32xbf16>, vector<8x32xf32> -> vector<8x32xf32>
    %cst_19 = arith.constant 0.000000e+00 : f32
    %38 = vector.broadcast %cst_19 : f32 to vector<8x32xf32>
    %39 = arith.maximumf %37, %38 : vector<8x32xf32>
    %cst_20 = arith.constant 1.000000e-03 : f32
    %40 = vector.broadcast %cst_20 : f32 to vector<8x32xf32>
    %41 = arith.addf %39, %40 : vector<8x32xf32>
    %42 = arith.truncf %30 : vector<8x32xf32> to vector<8x32xbf16>
    %43 = vector.extract_strided_slice %21 {offsets = [32, 0], sizes = [32, 32], strides = [1, 1]} : vector<64x32xbf16> to vector<32x32xbf16>
    %cst_21 = arith.constant dense<0.000000e+00> : vector<8x32xf32>
    %44 = tpu.matmul %42, %43, %cst_21 {dimension_numbers = #tpu.dot_dimension_numbers<[1], [0], [0], [1], [0, 0, 1, 1], [], []>} : vector<8x32xbf16>, vector<32x32xbf16>, vector<8x32xf32> -> vector<8x32xf32>
    %cst_22 = arith.constant 0.000000e+00 : f32
    %45 = vector.broadcast %cst_22 : f32 to vector<8x32xf32>
    %46 = arith.maximumf %44, %45 : vector<8x32xf32>
    %cst_23 = arith.constant 1.000000e-03 : f32
    %47 = vector.broadcast %cst_23 : f32 to vector<8x32xf32>
    %48 = arith.addf %46, %47 : vector<8x32xf32>
    %49 = vector.shape_cast %41 : vector<8x32xf32> to vector<1x8x32xf32>
    %50 = vector.shape_cast %48 : vector<8x32xf32> to vector<1x8x32xf32>
    %51 = vector.shape_cast %34 : vector<8x32xf32> to vector<1x8x32xf32>
    %cst_24 = arith.constant dense<0.000000e+00> : vector<1x32xf32>
    %52 = vector.multi_reduction <add>, %50, %cst_24 [1] : vector<1x8x32xf32> to vector<1x32xf32>
    %53 = vector.shape_cast %52 : vector<1x32xf32> to vector<1x1x32xf32>
    %54 = vector.broadcast %53 : vector<1x1x32xf32> to vector<1x8x32xf32>
    %55 = arith.mulf %49, %54 : vector<1x8x32xf32>
    %56 = vector.shape_cast %55 : vector<1x8x32xf32> to vector<8x32xf32>
    %57 = arith.truncf %56 : vector<8x32xf32> to vector<8x32xbf16>
    %cst_25 = arith.constant dense<0.000000e+00> : vector<8x32xf32>
    %58 = tpu.matmul %57, %22, %cst_25 {dimension_numbers = #tpu.dot_dimension_numbers<[1], [0], [0], [1], [0, 0, 1, 1], [], []>} : vector<8x32xbf16>, vector<32x32xbf16>, vector<8x32xf32> -> vector<8x32xf32>
    %59 = tpu.reciprocal %58 {approx = true} : vector<8x32xf32> -> vector<8x32xf32>
    %60 = arith.truncf %50 : vector<1x8x32xf32> to vector<1x8x32xbf16>
    %61 = arith.truncf %51 : vector<1x8x32xf32> to vector<1x8x32xbf16>
    "tpu.trace_start"() <{level = 10 : i32, message = "bsf,bsd->bfd"}> : () -> ()
    %cst_26 = arith.constant dense<0.000000e+00> : vector<1x32x32xf32>
    %62 = tpu.matmul %60, %61, %cst_26 {dimension_numbers = #tpu.dot_dimension_numbers<[1], [1], [2], [2], [0, 0, 0, 2, 1, 2], [0], [0]>} : vector<1x8x32xbf16>, vector<1x8x32xbf16>, vector<1x32x32xf32> -> vector<1x32x32xf32>
    "tpu.trace_stop"() : () -> ()
    %63 = arith.extf %22 : vector<32x32xbf16> to vector<32x32xf32>
    %64 = vector.shape_cast %63 : vector<32x32xf32> to vector<1x32x32xf32>
    %65 = arith.mulf %62, %64 : vector<1x32x32xf32>
    %66 = arith.truncf %65 : vector<1x32x32xf32> to vector<1x32x32xbf16>
    %67 = arith.truncf %49 : vector<1x8x32xf32> to vector<1x8x32xbf16>
    "tpu.trace_start"() <{level = 10 : i32, message = "bsf,bfd->bsd"}> : () -> ()
    %cst_27 = arith.constant dense<0.000000e+00> : vector<1x8x32xf32>
    %68 = tpu.matmul %67, %66, %cst_27 {dimension_numbers = #tpu.dot_dimension_numbers<[2], [1], [1], [2], [0, 0, 0, 1, 1, 2], [0], [0]>} : vector<1x8x32xbf16>, vector<1x32x32xbf16>, vector<1x8x32xf32> -> vector<1x8x32xf32>
    "tpu.trace_stop"() : () -> ()
    %69 = vector.shape_cast %68 : vector<1x8x32xf32> to vector<8x32xf32>
    %70 = arith.mulf %69, %59 : vector<8x32xf32>
    %71 = arith.truncf %70 : vector<8x32xf32> to vector<8x32xbf16>
    %c0_28 = arith.constant 0 : index
    %c0_29 = arith.constant 0 : index
    %c0_30 = arith.constant 0 : index
    %72 = vector.load %arg6[%c0_28, %c0_29, %c0_30] : memref<1x32x32xbf16, #tpu.memory_space<vmem>>, vector<1x32x32xbf16>
    %73 = vector.shape_cast %72 : vector<1x32x32xbf16> to vector<32x32xbf16>
    %cst_31 = arith.constant dense<0.000000e+00> : vector<8x32xf32>
    %74 = tpu.matmul %71, %73, %cst_31 {dimension_numbers = #tpu.dot_dimension_numbers<[1], [0], [0], [1], [0, 0, 1, 1], [], []>} : vector<8x32xbf16>, vector<32x32xbf16>, vector<8x32xf32> -> vector<8x32xf32>
    %75 = vector.broadcast %10 : vector<1x32xf32> to vector<8x32xf32>
    %76 = arith.addf %74, %75 : vector<8x32xf32>
    %77 = arith.addf %76, %3 : vector<8x32xf32>
    %cst_32 = arith.constant dense<0.000000e+00> : vector<8xf32>
    %78 = vector.multi_reduction <add>, %77, %cst_32 [1] : vector<8x32xf32> to vector<8xf32>
    %79 = vector.shape_cast %78 : vector<8xf32> to vector<8x1xf32>
    %cst_33 = arith.constant 3.200000e+01 : f32
    %80 = vector.broadcast %cst_33 : f32 to vector<8x1xf32>
    %81 = arith.divf %79, %80 : vector<8x1xf32>
    %82 = vector.broadcast %81 : vector<8x1xf32> to vector<8x32xf32>
    %83 = arith.subf %77, %82 : vector<8x32xf32>
    %84 = arith.mulf %83, %83 : vector<8x32xf32>
    %cst_34 = arith.constant dense<0.000000e+00> : vector<8xf32>
    %85 = vector.multi_reduction <add>, %84, %cst_34 [1] : vector<8x32xf32> to vector<8xf32>
    %86 = vector.shape_cast %85 : vector<8xf32> to vector<8x1xf32>
    %cst_35 = arith.constant 3.200000e+01 : f32
    %87 = vector.broadcast %cst_35 : f32 to vector<8x1xf32>
    %88 = arith.divf %86, %87 : vector<8x1xf32>
    %89 = vector.broadcast %81 : vector<8x1xf32> to vector<8x32xf32>
    %90 = arith.subf %77, %89 : vector<8x32xf32>
    %cst_36 = arith.constant 9.99999974E-6 : f32
    %91 = vector.broadcast %cst_36 : f32 to vector<8x1xf32>
    %92 = arith.addf %88, %91 : vector<8x1xf32>
    %93 = math.rsqrt %92 : vector<8x1xf32>
    %94 = vector.broadcast %93 : vector<8x1xf32> to vector<8x32xf32>
    %95 = arith.mulf %90, %94 : vector<8x32xf32>
    %96 = vector.broadcast %12 : vector<1x32xf32> to vector<8x32xf32>
    %97 = arith.mulf %95, %96 : vector<8x32xf32>
    %98 = vector.broadcast %13 : vector<1x32xf32> to vector<8x32xf32>
    %99 = arith.addf %97, %98 : vector<8x32xf32>
    %100 = arith.truncf %99 : vector<8x32xf32> to vector<8x32xbf16>
    %c0_37 = arith.constant 0 : index
    %c0_38 = arith.constant 0 : index
    %c0_39 = arith.constant 0 : index
    %101 = vector.load %arg7[%c0_37, %c0_38, %c0_39] : memref<1x32x64xbf16, #tpu.memory_space<vmem>>, vector<1x32x64xbf16>
    %102 = vector.shape_cast %101 : vector<1x32x64xbf16> to vector<32x64xbf16>
    %cst_40 = arith.constant dense<0.000000e+00> : vector<8x64xf32>
    %103 = tpu.matmul %100, %102, %cst_40 {dimension_numbers = #tpu.dot_dimension_numbers<[1], [0], [0], [1], [0, 0, 1, 1], [], []>} : vector<8x32xbf16>, vector<32x64xbf16>, vector<8x64xf32> -> vector<8x64xf32>
    %104 = vector.broadcast %17 : vector<1x64xf32> to vector<8x64xf32>
    %105 = arith.addf %103, %104 : vector<8x64xf32>
    %cst_41 = arith.constant 5.000000e-01 : f32
    %106 = vector.broadcast %cst_41 : f32 to vector<8x64xf32>
    %107 = arith.mulf %106, %105 : vector<8x64xf32>
    %cst_42 = arith.constant 0.707106769 : f32
    %108 = vector.broadcast %cst_42 : f32 to vector<8x64xf32>
    %109 = arith.mulf %105, %108 : vector<8x64xf32>
    %cst_43 = arith.constant 0.000000e+00 : f32
    %110 = vector.broadcast %cst_43 : f32 to vector<8x64xf32>
    %111 = arith.cmpf oge, %109, %110 : vector<8x64xf32>
    %cst_44 = arith.constant 1.000000e+00 : f32
    %cst_45 = arith.constant -1.000000e+00 : f32
    %112 = vector.broadcast %cst_44 : f32 to vector<8x64xf32>
    %113 = vector.broadcast %cst_45 : f32 to vector<8x64xf32>
    %114 = arith.select %111, %112, %113 : vector<8x64xi1>, vector<8x64xf32>
    %115 = math.absf %109 : vector<8x64xf32>
    %cst_46 = arith.constant 0.327591091 : f32
    %116 = vector.broadcast %cst_46 : f32 to vector<8x64xf32>
    %117 = arith.mulf %116, %115 : vector<8x64xf32>
    %cst_47 = arith.constant 1.000000e+00 : f32
    %118 = vector.broadcast %cst_47 : f32 to vector<8x64xf32>
    %119 = arith.addf %118, %117 : vector<8x64xf32>
    %120 = tpu.reciprocal %119 {approx = true} : vector<8x64xf32> -> vector<8x64xf32>
    %121 = arith.mulf %119, %120 : vector<8x64xf32>
    %cst_48 = arith.constant 2.000000e+00 : f32
    %122 = vector.broadcast %cst_48 : f32 to vector<8x64xf32>
    %123 = arith.subf %122, %121 : vector<8x64xf32>
    %124 = arith.mulf %120, %123 : vector<8x64xf32>
    %cst_49 = arith.constant 1.06140542 : f32
    %125 = vector.broadcast %cst_49 : f32 to vector<8x64xf32>
    %126 = arith.mulf %125, %124 : vector<8x64xf32>
    %cst_50 = arith.constant -1.45315206 : f32
    %127 = vector.broadcast %cst_50 : f32 to vector<8x64xf32>
    %128 = arith.addf %126, %127 : vector<8x64xf32>
    %129 = arith.mulf %128, %124 : vector<8x64xf32>
    %cst_51 = arith.constant 1.42141378 : f32
    %130 = vector.broadcast %cst_51 : f32 to vector<8x64xf32>
    %131 = arith.addf %129, %130 : vector<8x64xf32>
    %132 = arith.mulf %131, %124 : vector<8x64xf32>
    %cst_52 = arith.constant -0.284496725 : f32
    %133 = vector.broadcast %cst_52 : f32 to vector<8x64xf32>
    %134 = arith.addf %132, %133 : vector<8x64xf32>
    %135 = arith.mulf %134, %124 : vector<8x64xf32>
    %cst_53 = arith.constant 0.254829586 : f32
    %136 = vector.broadcast %cst_53 : f32 to vector<8x64xf32>
    %137 = arith.addf %135, %136 : vector<8x64xf32>
    %138 = arith.mulf %137, %124 : vector<8x64xf32>
    %cst_54 = arith.constant 0.000000e+00 : f32
    %139 = vector.broadcast %cst_54 : f32 to vector<8x64xf32>
    %140 = arith.subf %139, %115 : vector<8x64xf32>
    %141 = arith.mulf %140, %115 : vector<8x64xf32>
    %142 = math.exp %141 : vector<8x64xf32>
    %143 = arith.mulf %138, %142 : vector<8x64xf32>
    %cst_55 = arith.constant 1.000000e+00 : f32
    %144 = vector.broadcast %cst_55 : f32 to vector<8x64xf32>
    %145 = arith.subf %144, %143 : vector<8x64xf32>
    %146 = arith.mulf %114, %145 : vector<8x64xf32>
    %cst_56 = arith.constant 1.000000e+00 : f32
    %147 = vector.broadcast %cst_56 : f32 to vector<8x64xf32>
    %148 = arith.addf %147, %146 : vector<8x64xf32>
    %149 = arith.mulf %107, %148 : vector<8x64xf32>
    %150 = arith.truncf %149 : vector<8x64xf32> to vector<8x64xbf16>
    %c0_57 = arith.constant 0 : index
    %c0_58 = arith.constant 0 : index
    %c0_59 = arith.constant 0 : index
    %151 = vector.load %arg8[%c0_57, %c0_58, %c0_59] : memref<1x64x32xbf16, #tpu.memory_space<vmem>>, vector<1x64x32xbf16>
    %152 = vector.shape_cast %151 : vector<1x64x32xbf16> to vector<64x32xbf16>
    %cst_60 = arith.constant dense<0.000000e+00> : vector<8x32xf32>
    %153 = tpu.matmul %150, %152, %cst_60 {dimension_numbers = #tpu.dot_dimension_numbers<[1], [0], [0], [1], [0, 0, 1, 1], [], []>} : vector<8x64xbf16>, vector<64x32xbf16>, vector<8x32xf32> -> vector<8x32xf32>
    %154 = vector.broadcast %11 : vector<1x32xf32> to vector<8x32xf32>
    %155 = arith.addf %153, %154 : vector<8x32xf32>
    %156 = arith.addf %155, %99 : vector<8x32xf32>
    %cst_61 = arith.constant dense<0.000000e+00> : vector<8xf32>
    %157 = vector.multi_reduction <add>, %156, %cst_61 [1] : vector<8x32xf32> to vector<8xf32>
    %158 = vector.shape_cast %157 : vector<8xf32> to vector<8x1xf32>
    %cst_62 = arith.constant 3.200000e+01 : f32
    %159 = vector.broadcast %cst_62 : f32 to vector<8x1xf32>
    %160 = arith.divf %158, %159 : vector<8x1xf32>
    %161 = vector.broadcast %160 : vector<8x1xf32> to vector<8x32xf32>
    %162 = arith.subf %156, %161 : vector<8x32xf32>
    %163 = arith.mulf %162, %162 : vector<8x32xf32>
    %cst_63 = arith.constant dense<0.000000e+00> : vector<8xf32>
    %164 = vector.multi_reduction <add>, %163, %cst_63 [1] : vector<8x32xf32> to vector<8xf32>
    %165 = vector.shape_cast %164 : vector<8xf32> to vector<8x1xf32>
    %cst_64 = arith.constant 3.200000e+01 : f32
    %166 = vector.broadcast %cst_64 : f32 to vector<8x1xf32>
    %167 = arith.divf %165, %166 : vector<8x1xf32>
    %168 = vector.broadcast %160 : vector<8x1xf32> to vector<8x32xf32>
    %169 = arith.subf %156, %168 : vector<8x32xf32>
    %cst_65 = arith.constant 9.99999974E-6 : f32
    %170 = vector.broadcast %cst_65 : f32 to vector<8x1xf32>
    %171 = arith.addf %167, %170 : vector<8x1xf32>
    %172 = math.rsqrt %171 : vector<8x1xf32>
    %173 = vector.broadcast %172 : vector<8x1xf32> to vector<8x32xf32>
    %174 = arith.mulf %169, %173 : vector<8x32xf32>
    %175 = vector.broadcast %14 : vector<1x32xf32> to vector<8x32xf32>
    %176 = arith.mulf %174, %175 : vector<8x32xf32>
    %177 = vector.broadcast %15 : vector<1x32xf32> to vector<8x32xf32>
    %178 = arith.addf %176, %177 : vector<8x32xf32>
    %c0_66 = arith.constant 0 : index
    %c0_67 = arith.constant 0 : index
    %179 = vector.load %arg11[%c0_66, %c0_67] : memref<8x32xf32, #tpu.memory_space<vmem>>, vector<8x32xf32>
    tpu.vector_store %arg11[%c0_66, %c0_67], %178 {strides = array<i32>} : memref<8x32xf32, #tpu.memory_space<vmem>>, vector<8x32xf32>,
    return
  }
  func.func @transform_0(%arg0: i32, %arg1: i32) -> (i32, i32) {
    %c0_i32 = arith.constant 0 : i32
    %c0_i32_0 = arith.constant 0 : i32
    return %arg0, %c0_i32 : i32, i32
  }
  func.func @transform_1(%arg0: i32, %arg1: i32) -> (i32, i32) {
    %c0_i32 = arith.constant 0 : i32
    %c0_i32_0 = arith.constant 0 : i32
    %c0_i32_1 = arith.constant 0 : i32
    return %c0_i32, %c0_i32_0 : i32, i32
  }
  func.func @transform_2(%arg0: i32, %arg1: i32) -> (i32, i32, i32) {
    %c0_i32 = arith.constant 0 : i32
    %c0_i32_0 = arith.constant 0 : i32
    %c0_i32_1 = arith.constant 0 : i32
    return %arg1, %c0_i32, %c0_i32_0 : i32, i32, i32
  }
  func.func @transform_3(%arg0: i32, %arg1: i32) -> (i32, i32, i32) {
    %c0_i32 = arith.constant 0 : i32
    %c0_i32_0 = arith.constant 0 : i32
    %c0_i32_1 = arith.constant 0 : i32
    return %arg1, %c0_i32, %c0_i32_0 : i32, i32, i32
  }
  func.func @transform_4(%arg0: i32, %arg1: i32) -> (i32, i32, i32) {
    %c0_i32 = arith.constant 0 : i32
    %c0_i32_0 = arith.constant 0 : i32
    %c0_i32_1 = arith.constant 0 : i32
    return %arg1, %c0_i32, %c0_i32_0 : i32, i32, i32
  }
  func.func @transform_5(%arg0: i32, %arg1: i32) -> (i32, i32, i32) {
    %c0_i32 = arith.constant 0 : i32
    %c0_i32_0 = arith.constant 0 : i32
    %c0_i32_1 = arith.constant 0 : i32
    return %arg1, %c0_i32, %c0_i32_0 : i32, i32, i32
  }
  func.func @transform_6(%arg0: i32, %arg1: i32) -> (i32, i32, i32) {
    %c0_i32 = arith.constant 0 : i32
    %c0_i32_0 = arith.constant 0 : i32
    %c0_i32_1 = arith.constant 0 : i32
    return %arg1, %c0_i32, %c0_i32_0 : i32, i32, i32
  }
  func.func @transform_7(%arg0: i32, %arg1: i32) -> (i32, i32, i32) {
    %c0_i32 = arith.constant 0 : i32
    %c0_i32_0 = arith.constant 0 : i32
    %c0_i32_1 = arith.constant 0 : i32
    return %arg1, %c0_i32, %c0_i32_0 : i32, i32, i32
  }
  func.func @transform_8(%arg0: i32, %arg1: i32) -> (i32, i32, i32) {
    %c0_i32 = arith.constant 0 : i32
    %c0_i32_0 = arith.constant 0 : i32
    %c0_i32_1 = arith.constant 0 : i32
    return %arg1, %c0_i32, %c0_i32_0 : i32, i32, i32
  }
  func.func @transform_9(%arg0: i32, %arg1: i32) -> (i32, i32) {
    %c0_i32 = arith.constant 0 : i32
    %c0_i32_0 = arith.constant 0 : i32
    return %arg0, %c0_i32 : i32, i32
  }
}

</mosaic_0001>

<llo_original>
// kernel: tpu_custom_call.1
$region0: #{tpu_custom_call.1}
  #allocation0 [shape = 'u32[]', space=smem, size = 0x4, offset = 0x4, fixed_abs, tag = 'smem constant byte address 0x4 - core index']
  #allocation1 [shape = 'u32[72,128]{1,0:T(1,128)}', space=vmem, size = 0x9000, scoped, tag = 'internal scratch']
  %s0 = inlined_call_operand.vmem [shape: f32[16,32], index: 0, kind: input, shape index: {}]
  %s1 = inlined_call_operand.vmem [shape: bf16[32,32], index: 1, kind: input, shape index: {}]
  %s2 = inlined_call_operand.vmem [shape: bf16[2,96,32], index: 2, kind: input, shape index: {}]
  %s3 = inlined_call_operand.vmem [shape: bf16[2,64,32], index: 3, kind: input, shape index: {}]
  %s4 = inlined_call_operand.vmem [shape: bf16[2,32,32], index: 4, kind: input, shape index: {}]
  %s5 = inlined_call_operand.vmem [shape: bf16[2,32,64], index: 5, kind: input, shape index: {}]
  %s6 = inlined_call_operand.vmem [shape: bf16[2,64,32], index: 6, kind: input, shape index: {}]
  %s7 = inlined_call_operand.vmem [shape: f32[2,9,32], index: 7, kind: input, shape index: {}]
  %s8 = inlined_call_operand.vmem [shape: f32[2,1,64], index: 8, kind: input, shape index: {}]
  %s9 = inlined_call_operand.hbm [shape: f32[16,32], index: 9, kind: output, shape index: {}]
  %s10 = sld [smem:[#allocation0]]
  $region73: #{tpu_custom_call.1} parent=0
    _
  %s12 = ssub.s32 1, %s10
  %s13 = scalar_select 0, %s12, %s10
  $region1: #{tpu_custom_call.1} parent=0
    #allocation2 [shape = 'u8[8192]{0}', space=vmem, size = 0x2000, scoped, tag = 'output window, operand 0']
    #allocation3 [shape = 's32[2]{0}', space=sflag, size = 0x8, scoped, tag = 'scoped memory for tpu_custom_call.1']
    %14 = vsyncpa [#allocation3], 0
    %s15 = scalar_lea.sflag [#allocation3], 1
    %16 = vsyncpa %s15, 0
    loop: start=0, step=1, limit=6
    $region2: #{tpu_custom_call.1} parent=1 // loop_pre_header
      _
    $region3: #{tpu_custom_call.1} parent=1 // loop_header
      %s18 = sphi 0, %s22
      %p19 = scmp.ge.s32.totalorder %s18, 6
      %s25 = sphi 0, %s37
      %s26 = sphi 0, %s33
      %s27 = sphi 0, %s25
      %s28 = sphi 0, %s26
      %s29 = sphi 0, %s27
      %s30 = sphi 0, %s28
      %s40 = sphi 0, %s42
      %s43 = sphi 0, %s40
      %s44 = sphi 0, %s43
      %s60 = sphi 0, %s44
      %s64 = sphi 0, %s64
      %s66 = sphi 0, %s64
      %s67 = sphi 0, %s66
      %s81 = sphi 0, %s67
      %s87 = sphi 0, %s89
      %s90 = sphi 0, %s87
      %s91 = sphi 0, %s90
      %s107 = sphi 0, %s91
      %s113 = sphi 0, %s115
      %s116 = sphi 0, %s113
      %s117 = sphi 0, %s116
      %s133 = sphi 0, %s117
      %s139 = sphi 0, %s141
      %s142 = sphi 0, %s139
      %s143 = sphi 0, %s142
      %s159 = sphi 0, %s143
      %s165 = sphi 0, %s167
      %s168 = sphi 0, %s165
      %s169 = sphi 0, %s168
      %s185 = sphi 0, %s169
      %s191 = sphi 0, %s193
      %s194 = sphi 0, %s191
      %s195 = sphi 0, %s194
      %s211 = sphi 0, %s195
      %s217 = sphi 0, %s219
      %s220 = sphi 0, %s217
      %s221 = sphi 0, %s220
      %s237 = sphi 0, %s221
      %s243 = sphi 0, %s245
      %s246 = sphi 0, %s243
      %s247 = sphi 0, %s246
      %s263 = sphi 0, %s247
      %s269 = sphi 0, %s271
      %s272 = sphi 0, %s269
      %s273 = sphi 0, %s272
      %s289 = sphi 0, %s273
    $region4: #{tpu_custom_call.1} parent=1 // loop_header_branch
      %21 = sbr.rel (%p19) target = $region8
    $region5: #{tpu_custom_call.1} parent=1 // loop_body
      %s23 = ssub.s32 %s18, 1
      %s24 = ssub.s32 %s18, 2
      %s31 = sadd.s32 1, %s26
      %p32 = scmp.ge.s32.totalorder %s31, 2
      %s33 = scalar_select %p32, 0, %s31
      %s34 = sadd.s32 1, %s25
      %s35 = scalar_select %p32, %s34, %s25
      %p36 = scmp.ge.s32.totalorder %s35, 2
      %s37 = scalar_select %p36, 0, %s35
      %s38 = ssub.s32 %s25, %s37
      %p39 = scmp.eq.s32.totalorder %s38, 0
      %s41 = sadd.s32 %s40, 1
      %s42 = scalar_select %p39, %s40, %s41
      %p45 = pneg %p39
      %p46 = scmp.eq.s32.totalorder %s18, 3
      %p47 = por %p45, %p46
      %p48 = scmp.ne.s32.totalorder %s40, %s43
      %p49 = scmp.eq.s32.totalorder %s18, 0
      %p50 = por %p48, %p49
      %p51 = scmp.ne.s32.totalorder %s40, %s43
      %p52 = scmp.eq.s32.totalorder %s23, 3
      %p53 = por %p51, %p52
      %p54 = scmp.ne.s32.totalorder %s43, %s44
      %p55 = scmp.eq.s32.totalorder %s23, 0
      %p56 = por %p54, %p55
      %p57 = scmp.ne.s32.totalorder %s43, %s44
      %p58 = scmp.eq.s32.totalorder %s24, 3
      %p59 = por %p57, %p58
      %p61 = scmp.ne.s32.totalorder %s44, %s60
      %p62 = scmp.eq.s32.totalorder %s24, 0
      %p63 = por %p61, %p62
      %s65 = sadd.s32 %s64, 1
      %p68 = scmp.eq.s32.totalorder %s18, 3
      %p69 = scmp.ne.s32.totalorder %s64, %s66
      %p70 = scmp.eq.s32.totalorder %s18, 0
      %p71 = por %p69, %p70
      %p72 = scmp.ne.s32.totalorder %s64, %s66
      %p73 = scmp.eq.s32.totalorder %s23, 3
      %p74 = por %p72, %p73
      %p75 = scmp.ne.s32.totalorder %s66, %s67
      %p76 = scmp.eq.s32.totalorder %s23, 0
      %p77 = por %p75, %p76
      %p78 = scmp.ne.s32.totalorder %s66, %s67
      %p79 = scmp.eq.s32.totalorder %s24, 3
      %p80 = por %p78, %p79
      %p82 = scmp.ne.s32.totalorder %s67, %s81
      %p83 = scmp.eq.s32.totalorder %s24, 0
      %p84 = por %p82, %p83
      %s85 = ssub.s32 %s26, %s33
      %p86 = scmp.eq.s32.totalorder %s85, 0
      %s88 = sadd.s32 %s87, 1
      %s89 = scalar_select %p86, %s87, %s88
      %p92 = pneg %p86
      %p93 = scmp.eq.s32.totalorder %s18, 3
      %p94 = por %p92, %p93
      %p95 = scmp.ne.s32.totalorder %s87, %s90
      %p96 = scmp.eq.s32.totalorder %s18, 0
      %p97 = por %p95, %p96
      %p98 = scmp.ne.s32.totalorder %s87, %s90
      %p99 = scmp.eq.s32.totalorder %s23, 3
      %p100 = por %p98, %p99
      %p101 = scmp.ne.s32.totalorder %s90, %s91
      %p102 = scmp.eq.s32.totalorder %s23, 0
      %p103 = por %p101, %p102
      %p104 = scmp.ne.s32.totalorder %s90, %s91
      %p105 = scmp.eq.s32.totalorder %s24, 3
      %p106 = por %p104, %p105
      %p108 = scmp.ne.s32.totalorder %s91, %s107
      %p109 = scmp.eq.s32.totalorder %s24, 0
      %p110 = por %p108, %p109
      %s111 = ssub.s32 %s26, %s33
      %p112 = scmp.eq.s32.totalorder %s111, 0
      %s114 = sadd.s32 %s113, 1
      %s115 = scalar_select %p112, %s113, %s114
      %p118 = pneg %p112
      %p119 = scmp.eq.s32.totalorder %s18, 3
      %p120 = por %p118, %p119
      %p121 = scmp.ne.s32.totalorder %s113, %s116
      %p122 = scmp.eq.s32.totalorder %s18, 0
      %p123 = por %p121, %p122
      %p124 = scmp.ne.s32.totalorder %s113, %s116
      %p125 = scmp.eq.s32.totalorder %s23, 3
      %p126 = por %p124, %p125
      %p127 = scmp.ne.s32.totalorder %s116, %s117
      %p128 = scmp.eq.s32.totalorder %s23, 0
      %p129 = por %p127, %p128
      %p130 = scmp.ne.s32.totalorder %s116, %s117
      %p131 = scmp.eq.s32.totalorder %s24, 3
      %p132 = por %p130, %p131
      %p134 = scmp.ne.s32.totalorder %s117, %s133
      %p135 = scmp.eq.s32.totalorder %s24, 0
      %p136 = por %p134, %p135
      %s137 = ssub.s32 %s26, %s33
      %p138 = scmp.eq.s32.totalorder %s137, 0
      %s140 = sadd.s32 %s139, 1
      %s141 = scalar_select %p138, %s139, %s140
      %p144 = pneg %p138
      %p145 = scmp.eq.s32.totalorder %s18, 3
      %p146 = por %p144, %p145
      %p147 = scmp.ne.s32.totalorder %s139, %s142
      %p148 = scmp.eq.s32.totalorder %s18, 0
      %p149 = por %p147, %p148
      %p150 = scmp.ne.s32.totalorder %s139, %s142
      %p151 = scmp.eq.s32.totalorder %s23, 3
      %p152 = por %p150, %p151
      %p153 = scmp.ne.s32.totalorder %s142, %s143
      %p154 = scmp.eq.s32.totalorder %s23, 0
      %p155 = por %p153, %p154
      %p156 = scmp.ne.s32.totalorder %s142, %s143
      %p157 = scmp.eq.s32.totalorder %s24, 3
      %p158 = por %p156, %p157
      %p160 = scmp.ne.s32.totalorder %s143, %s159
      %p161 = scmp.eq.s32.totalorder %s24, 0
      %p162 = por %p160, %p161
      %s163 = ssub.s32 %s26, %s33
      %p164 = scmp.eq.s32.totalorder %s163, 0
      %s166 = sadd.s32 %s165, 1
      %s167 = scalar_select %p164, %s165, %s166
      %p170 = pneg %p164
      %p171 = scmp.eq.s32.totalorder %s18, 3
      %p172 = por %p170, %p171
      %p173 = scmp.ne.s32.totalorder %s165, %s168
      %p174 = scmp.eq.s32.totalorder %s18, 0
      %p175 = por %p173, %p174
      %p176 = scmp.ne.s32.totalorder %s165, %s168
      %p177 = scmp.eq.s32.totalorder %s23, 3
      %p178 = por %p176, %p177
      %p179 = scmp.ne.s32.totalorder %s168, %s169
      %p180 = scmp.eq.s32.totalorder %s23, 0
      %p181 = por %p179, %p180
      %p182 = scmp.ne.s32.totalorder %s168, %s169
      %p183 = scmp.eq.s32.totalorder %s24, 3
      %p184 = por %p182, %p183
      %p186 = scmp.ne.s32.totalorder %s169, %s185
      %p187 = scmp.eq.s32.totalorder %s24, 0
      %p188 = por %p186, %p187
      %s189 = ssub.s32 %s26, %s33
      %p190 = scmp.eq.s32.totalorder %s189, 0
      %s192 = sadd.s32 %s191, 1
      %s193 = scalar_select %p190, %s191, %s192
      %p196 = pneg %p190
      %p197 = scmp.eq.s32.totalorder %s18, 3
      %p198 = por %p196, %p197
      %p199 = scmp.ne.s32.totalorder %s191, %s194
      %p200 = scmp.eq.s32.totalorder %s18, 0
      %p201 = por %p199, %p200
      %p202 = scmp.ne.s32.totalorder %s191, %s194
      %p203 = scmp.eq.s32.totalorder %s23, 3
      %p204 = por %p202, %p203
      %p205 = scmp.ne.s32.totalorder %s194, %s195
      %p206 = scmp.eq.s32.totalorder %s23, 0
      %p207 = por %p205, %p206
      %p208 = scmp.ne.s32.totalorder %s194, %s195
      %p209 = scmp.eq.s32.totalorder %s24, 3
      %p210 = por %p208, %p209
      %p212 = scmp.ne.s32.totalorder %s195, %s211
      %p213 = scmp.eq.s32.totalorder %s24, 0
      %p214 = por %p212, %p213
      %s215 = ssub.s32 %s26, %s33
      %p216 = scmp.eq.s32.totalorder %s215, 0
      %s218 = sadd.s32 %s217, 1
      %s219 = scalar_select %p216, %s217, %s218
      %p222 = pneg %p216
      %p223 = scmp.eq.s32.totalorder %s18, 3
      %p224 = por %p222, %p223
      %p225 = scmp.ne.s32.totalorder %s217, %s220
      %p226 = scmp.eq.s32.totalorder %s18, 0
      %p227 = por %p225, %p226
      %p228 = scmp.ne.s32.totalorder %s217, %s220
      %p229 = scmp.eq.s32.totalorder %s23, 3
      %p230 = por %p228, %p229
      %p231 = scmp.ne.s32.totalorder %s220, %s221
      %p232 = scmp.eq.s32.totalorder %s23, 0
      %p233 = por %p231, %p232
      %p234 = scmp.ne.s32.totalorder %s220, %s221
      %p235 = scmp.eq.s32.totalorder %s24, 3
      %p236 = por %p234, %p235
      %p238 = scmp.ne.s32.totalorder %s221, %s237
      %p239 = scmp.eq.s32.totalorder %s24, 0
      %p240 = por %p238, %p239
      %s241 = ssub.s32 %s26, %s33
      %p242 = scmp.eq.s32.totalorder %s241, 0
      %s244 = sadd.s32 %s243, 1
      %s245 = scalar_select %p242, %s243, %s244
      %p248 = pneg %p242
      %p249 = scmp.eq.s32.totalorder %s18, 3
      %p250 = por %p248, %p249
      %p251 = scmp.ne.s32.totalorder %s243, %s246
      %p252 = scmp.eq.s32.totalorder %s18, 0
      %p253 = por %p251, %p252
      %p254 = scmp.ne.s32.totalorder %s243, %s246
      %p255 = scmp.eq.s32.totalorder %s23, 3
      %p256 = por %p254, %p255
      %p257 = scmp.ne.s32.totalorder %s246, %s247
      %p258 = scmp.eq.s32.totalorder %s23, 0
      %p259 = por %p257, %p258
      %p260 = scmp.ne.s32.totalorder %s246, %s247
      %p261 = scmp.eq.s32.totalorder %s24, 3
      %p262 = por %p260, %p261
      %p264 = scmp.ne.s32.totalorder %s247, %s263
      %p265 = scmp.eq.s32.totalorder %s24, 0
      %p266 = por %p264, %p265
      %s267 = ssub.s32 %s25, %s37
      %p268 = scmp.eq.s32.totalorder %s267, 0
      %s270 = sadd.s32 %s269, 1
      %s271 = scalar_select %p268, %s269, %s270
      %p274 = pneg %p268
      %p275 = scmp.eq.s32.totalorder %s18, 3
      %p276 = por %p274, %p275
      %p277 = scmp.ne.s32.totalorder %s269, %s272
      %p278 = scmp.eq.s32.totalorder %s18, 0
      %p279 = por %p277, %p278
      %p280 = scmp.ne.s32.totalorder %s269, %s272
      %p281 = scmp.eq.s32.totalorder %s23, 3
      %p282 = por %p280, %p281
      %p283 = scmp.ne.s32.totalorder %s272, %s273
      %p284 = scmp.eq.s32.totalorder %s23, 0
      %p285 = por %p283, %p284
      %p286 = scmp.ne.s32.totalorder %s272, %s273
      %p287 = scmp.eq.s32.totalorder %s24, 3
      %p288 = por %p286, %p287
      %p290 = scmp.ne.s32.totalorder %s273, %s289
      %p291 = scmp.eq.s32.totalorder %s24, 0
      %p292 = por %p290, %p291
      %p293 = scmp.le.s32.totalorder 1, %s18
      %p294 = scmp.lt.s32.totalorder %s18, 5
      %p295 = pnand %p293, %p294
      %p296 = pneg %p295
      // Predicated region
      $region9: #{tpu_custom_call.1} parent=5 // pred_check
        _
      $region10: #{tpu_custom_call.1} parent=5 // pred_check_branch
        %298 = sbr.rel (%p295) target = $region12
      $region11: #{tpu_custom_call.1} parent=5 // pred_region
        %s299 = ssub.s32 %s18, 1
        // Predicated region
        $region13: #{tpu_custom_call.1} parent=11 // pred_check
          %p300 = pneg %p77
        $region14: #{tpu_custom_call.1} parent=11 // pred_check_branch
          %302 = sbr.rel (%p300) target = $region16
        $region15: #{tpu_custom_call.1} parent=11 // pred_region
          _
        $region16: #{tpu_custom_call.1} parent=11 // pred_fallthru
          _
      $region12: #{tpu_custom_call.1} parent=5 // pred_fallthru
        _
      %p303 = scmp.lt.s32.totalorder %s18, 4
      // Predicated region
      $region17: #{tpu_custom_call.1} parent=5 // pred_check
        %p304 = pneg %p303
      $region18: #{tpu_custom_call.1} parent=5 // pred_check_branch
        %306 = sbr.rel (%p304) target = $region20
      $region19: #{tpu_custom_call.1} parent=5 // pred_region
        // Predicated region
        $region21: #{tpu_custom_call.1} parent=19 // pred_check
          %p307 = pneg %p50
        $region22: #{tpu_custom_call.1} parent=19 // pred_check_branch
          %309 = sbr.rel (%p307) target = $region24
        $region23: #{tpu_custom_call.1} parent=19 // pred_region
          %p310 = scmp.lt.s32.totalorder %s25, 1
          %s311 = scalar_select %p310, %s25, 1
          %s312 = smul.addr %s311, 8
          %s313 = scalar_lea.vmem %s0, %s312
        $region24: #{tpu_custom_call.1} parent=19 // pred_fallthru
          _
        // Predicated region
        $region25: #{tpu_custom_call.1} parent=19 // pred_check
          %p314 = pneg %p97
        $region26: #{tpu_custom_call.1} parent=19 // pred_check_branch
          %316 = sbr.rel (%p314) target = $region28
        $region27: #{tpu_custom_call.1} parent=19 // pred_region
          %p317 = scmp.lt.s32.totalorder %s26, 1
          %s318 = scalar_select %p317, %s26, 1
          %s319 = smul.addr %s318, 12
          %s320 = smul.addr %s319, 4
          %s321 = scalar_lea.vmem %s2, %s320
        $region28: #{tpu_custom_call.1} parent=19 // pred_fallthru
          _
        // Predicated region
        $region29: #{tpu_custom_call.1} parent=19 // pred_check
          %p322 = pneg %p123
        $region30: #{tpu_custom_call.1} parent=19 // pred_check_branch
          %324 = sbr.rel (%p322) target = $region32
        $region31: #{tpu_custom_call.1} parent=19 // pred_region
          %p325 = scmp.lt.s32.totalorder %s26, 1
          %s326 = scalar_select %p325, %s26, 1
          %s327 = smul.addr %s326, 8
          %s328 = smul.addr %s327, 4
          %s329 = scalar_lea.vmem %s3, %s328
        $region32: #{tpu_custom_call.1} parent=19 // pred_fallthru
          _
        // Predicated region
        $region33: #{tpu_custom_call.1} parent=19 // pred_check
          %p330 = pneg %p149
        $region34: #{tpu_custom_call.1} parent=19 // pred_check_branch
          %332 = sbr.rel (%p330) target = $region36
        $region35: #{tpu_custom_call.1} parent=19 // pred_region
          %p333 = scmp.lt.s32.totalorder %s26, 1
          %s334 = scalar_select %p333, %s26, 1
          %s335 = smul.addr %s334, 4
          %s336 = smul.addr %s335, 4
          %s337 = scalar_lea.vmem %s4, %s336
        $region36: #{tpu_custom_call.1} parent=19 // pred_fallthru
          _
        // Predicated region
        $region37: #{tpu_custom_call.1} parent=19 // pred_check
          %p338 = pneg %p175
        $region38: #{tpu_custom_call.1} parent=19 // pred_check_branch
          %340 = sbr.rel (%p338) target = $region40
        $region39: #{tpu_custom_call.1} parent=19 // pred_region
          %p341 = scmp.lt.s32.totalorder %s26, 1
          %s342 = scalar_select %p341, %s26, 1
          %s343 = smul.addr %s342, 4
          %s344 = smul.addr %s343, 4
          %s345 = scalar_lea.vmem %s5, %s344
        $region40: #{tpu_custom_call.1} parent=19 // pred_fallthru
          _
        // Predicated region
        $region41: #{tpu_custom_call.1} parent=19 // pred_check
          %p346 = pneg %p201
        $region42: #{tpu_custom_call.1} parent=19 // pred_check_branch
          %348 = sbr.rel (%p346) target = $region44
        $region43: #{tpu_custom_call.1} parent=19 // pred_region
          %p349 = scmp.lt.s32.totalorder %s26, 1
          %s350 = scalar_select %p349, %s26, 1
          %s351 = smul.addr %s350, 8
          %s352 = smul.addr %s351, 4
          %s353 = scalar_lea.vmem %s6, %s352
        $region44: #{tpu_custom_call.1} parent=19 // pred_fallthru
          _
        // Predicated region
        $region45: #{tpu_custom_call.1} parent=19 // pred_check
          %p354 = pneg %p227
        $region46: #{tpu_custom_call.1} parent=19 // pred_check_branch
          %356 = sbr.rel (%p354) target = $region48
        $region47: #{tpu_custom_call.1} parent=19 // pred_region
          %p357 = scmp.lt.s32.totalorder %s26, 1
          %s358 = scalar_select %p357, %s26, 1
          %s359 = smul.addr %s358, 2
          %s360 = smul.addr %s359, 8
          %s361 = scalar_lea.vmem %s7, %s360
        $region48: #{tpu_custom_call.1} parent=19 // pred_fallthru
          _
        // Predicated region
        $region49: #{tpu_custom_call.1} parent=19 // pred_check
          %p362 = pneg %p253
        $region50: #{tpu_custom_call.1} parent=19 // pred_check_branch
          %364 = sbr.rel (%p362) target = $region52
        $region51: #{tpu_custom_call.1} parent=19 // pred_region
          %p365 = scmp.lt.s32.totalorder %s26, 1
          %s366 = scalar_select %p365, %s26, 1
          %s367 = scalar_lea.vmem %s8, %s366
        $region52: #{tpu_custom_call.1} parent=19 // pred_fallthru
          _
      $region20: #{tpu_custom_call.1} parent=5 // pred_fallthru
        _
      %p368 = scmp.le.s32.totalorder 1, %s18
      %p369 = scmp.lt.s32.totalorder %s18, 5
      %p370 = pnand %p368, %p369
      %p371 = pneg %p370
      // Predicated region
      $region53: #{tpu_custom_call.1} parent=5 // pred_check
        _
      $region54: #{tpu_custom_call.1} parent=5 // pred_check_branch
        %373 = sbr.rel (%p370) target = $region56
      $region55: #{tpu_custom_call.1} parent=5 // pred_region
        %s374 = ssub.s32 %s18, 1
        %p375 = scmp.lt.s32.totalorder %s27, 1
        %s376 = scalar_select %p375, %s27, 1
        %s377 = smul.addr %s376, 8
        %s378 = scalar_lea.vmem %s0, %s377
        %p379 = pneg %p56
        %p380 = pneg %p53
        %p381 = pneg %p77
        %p382 = pneg %p74
        %p383 = scmp.lt.s32.totalorder %s28, 1
        %s384 = scalar_select %p383, %s28, 1
        %s385 = smul.addr %s384, 12
        %s386 = smul.addr %s385, 4
        %s387 = scalar_lea.vmem %s2, %s386
        %p388 = pneg %p103
        %p389 = pneg %p100
        %p390 = scmp.lt.s32.totalorder %s28, 1
        %s391 = scalar_select %p390, %s28, 1
        %s392 = smul.addr %s391, 8
        %s393 = smul.addr %s392, 4
        %s394 = scalar_lea.vmem %s3, %s393
        %p395 = pneg %p129
        %p396 = pneg %p126
        %p397 = scmp.lt.s32.totalorder %s28, 1
        %s398 = scalar_select %p397, %s28, 1
        %s399 = smul.addr %s398, 4
        %s400 = smul.addr %s399, 4
        %s401 = scalar_lea.vmem %s4, %s400
        %p402 = pneg %p155
        %p403 = pneg %p152
        %p404 = scmp.lt.s32.totalorder %s28, 1
        %s405 = scalar_select %p404, %s28, 1
        %s406 = smul.addr %s405, 4
        %s407 = smul.addr %s406, 4
        %s408 = scalar_lea.vmem %s5, %s407
        %p409 = pneg %p181
        %p410 = pneg %p178
        %p411 = scmp.lt.s32.totalorder %s28, 1
        %s412 = scalar_select %p411, %s28, 1
        %s413 = smul.addr %s412, 8
        %s414 = smul.addr %s413, 4
        %s415 = scalar_lea.vmem %s6, %s414
        %p416 = pneg %p207
        %p417 = pneg %p204
        %p418 = scmp.lt.s32.totalorder %s28, 1
        %s419 = scalar_select %p418, %s28, 1
        %s420 = smul.addr %s419, 2
        %s421 = smul.addr %s420, 8
        %s422 = scalar_lea.vmem %s7, %s421
        %p423 = pneg %p233
        %p424 = pneg %p230
        %p425 = scmp.lt.s32.totalorder %s28, 1
        %s426 = scalar_select %p425, %s28, 1
        %s427 = scalar_lea.vmem %s8, %s426
        %p428 = pneg %p259
        %p429 = pneg %p256
        %p430 = pneg %p285
        %p431 = pneg %p282
        %s432 = sand.u32 %s272, 1
        %s433 = scalar_lea.sflag [#allocation3], %s432
        %s434 = sand.u32 %s272, 1
        %s435 = smul.addr %s434, 8
        %s436 = scalar_lea.vmem [#allocation2], %s435
        %p437 = scmp.lt.s32.totalorder %s27, 1
        %s438 = scalar_select %p437, %s27, 1
        %s439 = smul.addr %s438, 8
        %s440 = scalar_lea.vmem %s0, %s439
        %p441 = scmp.lt.s32.totalorder %s28, 1
        %s442 = scalar_select %p441, %s28, 1
        %s443 = smul.addr %s442, 12
        %s444 = smul.addr %s443, 4
        %s445 = scalar_lea.vmem %s2, %s444
        %p446 = scmp.lt.s32.totalorder %s28, 1
        %s447 = scalar_select %p446, %s28, 1
        %s448 = smul.addr %s447, 8
        %s449 = smul.addr %s448, 4
        %s450 = scalar_lea.vmem %s3, %s449
        %p451 = scmp.lt.s32.totalorder %s28, 1
        %s452 = scalar_select %p451, %s28, 1
        %s453 = smul.addr %s452, 4
        %s454 = smul.addr %s453, 4
        %s455 = scalar_lea.vmem %s4, %s454
        %p456 = scmp.lt.s32.totalorder %s28, 1
        %s457 = scalar_select %p456, %s28, 1
        %s458 = smul.addr %s457, 4
        %s459 = smul.addr %s458, 4
        %s460 = scalar_lea.vmem %s5, %s459
        %p461 = scmp.lt.s32.totalorder %s28, 1
        %s462 = scalar_select %p461, %s28, 1
        %s463 = smul.addr %s462, 8
        %s464 = smul.addr %s463, 4
        %s465 = scalar_lea.vmem %s6, %s464
        %p466 = scmp.lt.s32.totalorder %s28, 1
        %s467 = scalar_select %p466, %s28, 1
        %s468 = smul.addr %s467, 2
        %s469 = smul.addr %s468, 8
        %s470 = scalar_lea.vmem %s7, %s469
        %p471 = scmp.lt.s32.totalorder %s28, 1
        %s472 = scalar_select %p471, %s28, 1
        %s473 = scalar_lea.vmem %s8, %s472
        %p475 = scmp.eq.s32.totalorder %s28, 0
        // Predicated region
        $region57: #{tpu_custom_call.1} parent=55 // pred_check
          %p476 = pneg %p475
        $region58: #{tpu_custom_call.1} parent=55 // pred_check_branch
          %478 = sbr.rel (%p476) target = $region60
        $region59: #{tpu_custom_call.1} parent=55 // pred_region
          %v479 = vld [vmem:[%s440] sm:$0xff]
          %vm480 = vcmask 261120
          %481 = vst.msk [vmem:[%s436] sm:$0xff] %vm480, %v479
        $region60: #{tpu_custom_call.1} parent=55 // pred_fallthru
          _
        %v482 = vld [vmem:[%s436] sm:$0xff]
        %v483 = vpack.c.bf16 %v482, %v482
        %v484 = vld [vmem:[%s470] sm:$0xff]
        %v485 = vld [vmem:[%s470 + $0x8] sm:$0x1]
        %v486 = vld [vmem:[%s473] sm:$0x1]
        %v487 = vld [vmem:[%s445] sm:$0xf]
        %v488 = vld [vmem:[%s445 + $0x4] sm:$0xf]
        %v489 = vld [vmem:[%s445 + $0x8] sm:$0xf]
        %v490 = vld [vmem:[%s445 + $0xc] sm:$0xf]
        %v491 = vld [vmem:[%s445 + $0x10] sm:$0xf]
        %v492 = vld [vmem:[%s445 + $0x14] sm:$0xf]
        %v493 = vld [vmem:[%s445 + $0x18] sm:$0xf]
        %v494 = vld [vmem:[%s445 + $0x1c] sm:$0xf]
        %v495 = vld [vmem:[%s445 + $0x20] sm:$0xf]
        %v496 = vld [vmem:[%s445 + $0x24] sm:$0xf]
        %v497 = vld [vmem:[%s445 + $0x28] sm:$0xf]
        %v498 = vld [vmem:[%s445 + $0x2c] sm:$0xf]
        %v499 = vld [vmem:[%s450] sm:$0xf]
        %v500 = vld [vmem:[%s450 + $0x4] sm:$0xf]
        %v501 = vld [vmem:[%s450 + $0x8] sm:$0xf]
        %v502 = vld [vmem:[%s450 + $0xc] sm:$0xf]
        %v503 = vld [vmem:[%s450 + $0x10] sm:$0xf]
        %v504 = vld [vmem:[%s450 + $0x14] sm:$0xf]
        %v505 = vld [vmem:[%s450 + $0x18] sm:$0xf]
        %v506 = vld [vmem:[%s450 + $0x1c] sm:$0xf]
        %v507 = vld [vmem:[%s1] sm:$0xf]
        %v508 = vld [vmem:[%s1 + $0x4] sm:$0xf]
        %v509 = vld [vmem:[%s1 + $0x8] sm:$0xf]
        %v510 = vld [vmem:[%s1 + $0xc] sm:$0xf]
        %v511 = vperm.slane %v484, 0
        %v516 = vunpack.c.l.b16 %v487
        %v517 = vunpack.c.l.b16 %v488
        %v518 = vunpack.c.l.b16 %v489
        %v519 = vunpack.c.l.b16 %v490
        %v520 = vpack.c.b16 %v517, %v516
        %v521 = vpack.c.b16 %v519, %v518
        %vm524 = vcmask 261120
        %v526 = vsel %vm524, %v483, 0
        %528 = vmatpush.bf16.msra.mxu0 0
        %529 = vmatpush.bf16.msra.mxu0 0
        %530 = vmatpush.bf16.msra.mxu0 0
        %531 = vmatpush.bf16.msra.mxu0 0
        %532 = vmatpush.bf16.msra.mxu0 0
        %533 = vmatpush.bf16.msra.mxu0 0
        %534 = vmatpush.bf16.msra.mxu0 %v521
        %535 = vmatpush.bf16.msra.mxu0 %v520
        %536 = vmatmul.bf16.gmra.mxu0 %v526
        %v537 = vpop.f32.mrf.mxu0
        %v538 = vadd.f32 %v511, %v537
        %v539 = vpop.f32.mrf.mxu0
        %540 = vdwg.mxu0
        %v541 = vperm.slane %v484, 1
        %v546 = vunpack.c.l.b16 %v491
        %v547 = vunpack.c.l.b16 %v492
        %v548 = vunpack.c.l.b16 %v493
        %v549 = vunpack.c.l.b16 %v494
        %v550 = vpack.c.b16 %v547, %v546
        %v551 = vpack.c.b16 %v549, %v548
        %554 = vmatpush.bf16.msra.mxu0 0
        %555 = vmatpush.bf16.msra.mxu0 0
        %556 = vmatpush.bf16.msra.mxu0 0
        %557 = vmatpush.bf16.msra.mxu0 0
        %558 = vmatpush.bf16.msra.mxu0 0
        %559 = vmatpush.bf16.msra.mxu0 0
        %560 = vmatpush.bf16.msra.mxu0 %v551
        %561 = vmatpush.bf16.msra.mxu0 %v550
        %562 = vmatmul.bf16.gmra.mxu0 %v526
        %v563 = vpop.f32.mrf.mxu0
        %v564 = vadd.f32 %v541, %v563
        %v565 = vpop.f32.mrf.mxu0
        %566 = vdwg.mxu0
        %v567 = vperm.slane %v484, 2
        %v572 = vunpack.c.l.b16 %v495
        %v573 = vunpack.c.l.b16 %v496
        %v574 = vunpack.c.l.b16 %v497
        %v575 = vunpack.c.l.b16 %v498
        %v576 = vpack.c.b16 %v573, %v572
        %v577 = vpack.c.b16 %v575, %v574
        %580 = vmatpush.bf16.msra.mxu0 0
        %581 = vmatpush.bf16.msra.mxu0 0
        %582 = vmatpush.bf16.msra.mxu0 0
        %583 = vmatpush.bf16.msra.mxu0 0
        %584 = vmatpush.bf16.msra.mxu0 0
        %585 = vmatpush.bf16.msra.mxu0 0
        %586 = vmatpush.bf16.msra.mxu0 %v577
        %587 = vmatpush.bf16.msra.mxu0 %v576
        %588 = vmatmul.bf16.gmra.mxu0 %v526
        %v589 = vpop.f32.mrf.mxu0
        %v590 = vadd.f32 %v567, %v589
        %v591 = vpop.f32.mrf.mxu0
        %592 = vdwg.mxu0
        %v593 = vpack.c.bf16 %v538, %v538
        %v598 = vunpack.c.l.b16 %v499
        %v599 = vunpack.c.l.b16 %v500
        %v600 = vunpack.c.l.b16 %v501
        %v601 = vunpack.c.l.b16 %v502
        %v602 = vpack.c.b16 %v599, %v598
        %v603 = vpack.c.b16 %v601, %v600
        %v607 = vsel %vm524, %v593, 0
        %609 = vmatpush.bf16.msra.mxu0 0
        %610 = vmatpush.bf16.msra.mxu0 0
        %611 = vmatpush.bf16.msra.mxu0 0
        %612 = vmatpush.bf16.msra.mxu0 0
        %613 = vmatpush.bf16.msra.mxu0 0
        %614 = vmatpush.bf16.msra.mxu0 0
        %615 = vmatpush.bf16.msra.mxu0 %v603
        %616 = vmatpush.bf16.msra.mxu0 %v602
        %617 = vmatmul.bf16.gmra.mxu0 %v607
        %v618 = vpop.f32.mrf.mxu0
        %v619 = vadd.f32 0.0, %v618
        %v620 = vpop.f32.mrf.mxu0
        %621 = vdwg.mxu0
        %v622 = vmax.f32 %v619, 0.0
        %v623 = vadd.f32 %v622, 0.001
        %v624 = vpack.c.bf16 %v564, %v564
        %v629 = vunpack.c.l.b16 %v503
        %v630 = vunpack.c.l.b16 %v504
        %v631 = vunpack.c.l.b16 %v505
        %v632 = vunpack.c.l.b16 %v506
        %v633 = vpack.c.b16 %v630, %v629
        %v634 = vpack.c.b16 %v632, %v631
        %v638 = vsel %vm524, %v624, 0
        %640 = vmatpush.bf16.msra.mxu0 0
        %641 = vmatpush.bf16.msra.mxu0 0
        %642 = vmatpush.bf16.msra.mxu0 0
        %643 = vmatpush.bf16.msra.mxu0 0
        %644 = vmatpush.bf16.msra.mxu0 0
        %645 = vmatpush.bf16.msra.mxu0 0
        %646 = vmatpush.bf16.msra.mxu0 %v634
        %647 = vmatpush.bf16.msra.mxu0 %v633
        %648 = vmatmul.bf16.gmra.mxu0 %v638
        %v649 = vpop.f32.mrf.mxu0
        %v650 = vadd.f32 0.0, %v649
        %v651 = vpop.f32.mrf.mxu0
        %652 = vdwg.mxu0
        %v653 = vmax.f32 %v650, 0.0
        %v654 = vadd.f32 %v653, 0.001
        %v655 = vsel %vm524, %v654, 0.0
        %v656 = vrot.slane %v655, 4
        %v657 = vadd.f32 %v655, %v656
        %v658 = vrot.slane %v657, 2
        %v659 = vadd.f32 %v657, %v658
        %v660 = vrot.slane %v659, 1
        %v661 = vadd.f32 %v659, %v660
        %v662 = vmul.f32 %v623, %v661
        %v663 = vpack.c.bf16 %v662, %v662
        %v668 = vunpack.c.l.b16 %v507
        %v669 = vunpack.c.l.b16 %v508
        %v670 = vunpack.c.l.b16 %v509
        %v671 = vunpack.c.l.b16 %v510
        %v672 = vpack.c.b16 %v669, %v668
        %v673 = vpack.c.b16 %v671, %v670
        %v677 = vsel %vm524, %v663, 0
        %679 = vmatpush.bf16.msra.mxu0 0
        %680 = vmatpush.bf16.msra.mxu0 0
        %681 = vmatpush.bf16.msra.mxu0 0
        %682 = vmatpush.bf16.msra.mxu0 0
        %683 = vmatpush.bf16.msra.mxu0 0
        %684 = vmatpush.bf16.msra.mxu0 0
        %685 = vmatpush.bf16.msra.mxu0 %v673
        %686 = vmatpush.bf16.msra.mxu0 %v672
        %687 = vmatmul.bf16.gmra.mxu0 %v677
        %v688 = vpop.f32.mrf.mxu0
        %v689 = vadd.f32 0.0, %v688
        %v690 = vpop.f32.mrf.mxu0
        %691 = vdwg.mxu0
        %v692 = vrcp.pop %v689
        %v693 = vpack.c.bf16 %v654, %v654
        %v694 = vpack.c.bf16 %v590, %v590
        %695 = vxpose.xlu0.c.b16.start [1/8] %v693, 128
        %696 = vxpose.xlu0.c.b16.cont [2/8] 0, 128
        %697 = vxpose.xlu0.c.b16.cont [3/8] 0, 128
        %698 = vxpose.xlu0.c.b16.cont [4/8] 0, 128
        %699 = vxpose.xlu0.c.b16.cont [5/8] 0, 128
        %700 = vxpose.xlu0.c.b16.cont [6/8] 0, 128
        %701 = vxpose.xlu0.c.b16.cont [7/8] 0, 128
        %702 = vxpose.xlu0.c.b16.end [8/8] 0, 128
        %v703 = vpop.trf.xlu0
        %v704 = vpop.trf.xlu0
        %v705 = vpop.trf.xlu0
        %v706 = vpop.trf.xlu0
        %v707 = vpop.trf.xlu0
        %v708 = vpop.trf.xlu0
        %v709 = vpop.trf.xlu0
        %v710 = vpop.trf.xlu0
        %vm711 = vcmask 64512
        %v713 = vsel %vm711, %v703, 0
        %v716 = vsel %vm711, %v704, 0
        %vm718 = vcmask 1043456
        %v720 = vsel %vm718, %v694, 0
        %722 = vmatpush.bf16.msra.mxu0 0
        %723 = vmatpush.bf16.msra.mxu0 0
        %724 = vmatpush.bf16.msra.mxu0 0
        %725 = vmatpush.bf16.msra.mxu0 0
        %726 = vmatpush.bf16.msra.mxu0 0
        %727 = vmatpush.bf16.msra.mxu0 0
        %728 = vmatpush.bf16.msra.mxu0 0
        %729 = vmatpush.bf16.msra.mxu0 %v720
        %730 = vmatmul.bf16.gmra.mxu0 %v713
        %v731 = vpop.f32.mrf.mxu0
        %v732 = vadd.f32 0.0, %v731
        %v733 = vpop.f32.mrf.mxu0
        %v734 = vadd.f32 0.0, %v733
        %735 = vmatmul.bf16.gmra.mxu0 %v716
        %v736 = vpop.f32.mrf.mxu0
        %v737 = vadd.f32 0.0, %v736
        %v738 = vpop.f32.mrf.mxu0
        %v739 = vadd.f32 0.0, %v738
        %740 = vdwg.mxu0
        %v741 = vunpack.c.l.bf16 %v507
        %v742 = vunpack.c.l.bf16 %v508
        %v743 = vunpack.c.l.bf16 %v509
        %v744 = vunpack.c.l.bf16 %v510
        %v745 = vmul.f32 %v732, %v741
        %v746 = vmul.f32 %v734, %v742
        %v747 = vmul.f32 %v737, %v743
        %v748 = vmul.f32 %v739, %v744
        %v749 = vpack.c.bf16 %v745, %v745
        %v750 = vpack.c.bf16 %v746, %v746
        %v751 = vpack.c.bf16 %v747, %v747
        %v752 = vpack.c.bf16 %v748, %v748
        %v753 = vpack.c.bf16 %v623, %v623
        %v758 = vunpack.c.l.b16 %v749
        %v759 = vunpack.c.l.b16 %v750
        %v760 = vunpack.c.l.b16 %v751
        %v761 = vunpack.c.l.b16 %v752
        %v762 = vpack.c.b16 %v759, %v758
        %v763 = vpack.c.b16 %v761, %v760
        %v767 = vsel %vm524, %v753, 0
        %769 = vmatpush.bf16.msra.mxu0 0
        %770 = vmatpush.bf16.msra.mxu0 0
        %771 = vmatpush.bf16.msra.mxu0 0
        %772 = vmatpush.bf16.msra.mxu0 0
        %773 = vmatpush.bf16.msra.mxu0 0
        %774 = vmatpush.bf16.msra.mxu0 0
        %775 = vmatpush.bf16.msra.mxu0 %v763
        %776 = vmatpush.bf16.msra.mxu0 %v762
        %777 = vmatmul.bf16.gmra.mxu0 %v767
        %v778 = vpop.f32.mrf.mxu0
        %v779 = vadd.f32 0.0, %v778
        %v780 = vpop.f32.mrf.mxu0
        %781 = vdwg.mxu0
        %v782 = vmul.f32 %v779, %v692
        %v783 = vpack.c.bf16 %v782, %v782
        %v784 = vld [vmem:[%s455] sm:$0xf]
        %v785 = vld [vmem:[%s455 + $0x4] sm:$0xf]
        %v786 = vld [vmem:[%s455 + $0x8] sm:$0xf]
        %v787 = vld [vmem:[%s455 + $0xc] sm:$0xf]
        %v788 = vperm.slane %v484, 3
        %v793 = vunpack.c.l.b16 %v784
        %v794 = vunpack.c.l.b16 %v785
        %v795 = vunpack.c.l.b16 %v786
        %v796 = vunpack.c.l.b16 %v787
        %v797 = vpack.c.b16 %v794, %v793
        %v798 = vpack.c.b16 %v796, %v795
        %v802 = vsel %vm524, %v783, 0
        %804 = vmatpush.bf16.msra.mxu0 0
        %805 = vmatpush.bf16.msra.mxu0 0
        %806 = vmatpush.bf16.msra.mxu0 0
        %807 = vmatpush.bf16.msra.mxu0 0
        %808 = vmatpush.bf16.msra.mxu0 0
        %809 = vmatpush.bf16.msra.mxu0 0
        %810 = vmatpush.bf16.msra.mxu0 %v798
        %811 = vmatpush.bf16.msra.mxu0 %v797
        %812 = vmatmul.bf16.gmra.mxu0 %v802
        %v813 = vpop.f32.mrf.mxu0
        %v814 = vadd.f32 %v788, %v813
        %v815 = vpop.f32.mrf.mxu0
        %816 = vdwg.mxu0
        %v817 = vadd.f32 %v814, %v482
        %v818 = vsel %vm524, %v817, 0.0
        %819 = vadd.xlane.f32.xlu0 %v818
        %v820 = vpop.xlane.xlu0 %819
        %v821 = vrcp.pop 32.0
        %v822 = vmul.f32 32.0, %v821
        %v823 = vsub.f32 1.0, %v822
        %v824 = vmul.f32 %v821, %v823
        %v825 = vadd.f32 %v821, %v824
        %vm826 = vweird.f32 %v821
        %v827 = vsel %vm826, %v821, %v825
        %v828 = vmul.f32 %v820, %v827
        %v829 = vsub.f32 %v817, %v828
        %v830 = vmul.f32 %v829, %v829
        %v831 = vsel %vm524, %v830, 0.0
        %832 = vadd.xlane.f32.xlu0 %v831
        %v833 = vpop.xlane.xlu0 %832
        %v834 = vmul.f32 %v833, %v827
        %v835 = vadd.f32 %v834, 1e-05
        %v836 = vrsqrt.pop %v835
        %v837 = vmul.f32 %v836, %v835
        %v838 = vmul.f32 %v837, %v836
        %v839 = vmul.f32 0.5, %v838
        %v840 = vsub.f32 1.5, %v839
        %v841 = vmul.f32 %v836, %v840
        %vm842 = vweird.f32 %v835
        %vm843 = vweird.f32 %v836
        %vm844 = vmor %vm842, %vm843
        %v845 = vsel %vm844, %v836, %v841
        %v846 = vmul.f32 %v829, %v845
        %v847 = vperm.slane %v484, 5
        %v848 = vmul.f32 %v846, %v847
        %v849 = vperm.slane %v484, 6
        %v850 = vadd.f32 %v848, %v849
        %v851 = vpack.c.bf16 %v850, %v850
        %v852 = vld [vmem:[%s460] sm:$0xf]
        %v853 = vld [vmem:[%s460 + $0x4] sm:$0xf]
        %v854 = vld [vmem:[%s460 + $0x8] sm:$0xf]
        %v855 = vld [vmem:[%s460 + $0xc] sm:$0xf]
        %v857 = vperm.slane %v486, 0
        %v863 = vunpack.c.l.b16 %v852
        %v864 = vunpack.c.l.b16 %v853
        %v865 = vunpack.c.l.b16 %v854
        %v866 = vunpack.c.l.b16 %v855
        %v867 = vpack.c.b16 %v864, %v863
        %v868 = vpack.c.b16 %v866, %v865
        %v872 = vsel %vm524, %v851, 0
        %874 = vmatpush.bf16.msra.mxu0 0
        %875 = vmatpush.bf16.msra.mxu0 0
        %876 = vmatpush.bf16.msra.mxu0 0
        %877 = vmatpush.bf16.msra.mxu0 0
        %878 = vmatpush.bf16.msra.mxu0 0
        %879 = vmatpush.bf16.msra.mxu0 0
        %880 = vmatpush.bf16.msra.mxu0 %v868
        %881 = vmatpush.bf16.msra.mxu0 %v867
        %882 = vmatmul.bf16.gmra.mxu0 %v872
        %v883 = vpop.f32.mrf.mxu0
        %v884 = vadd.f32 %v857, %v883
        %v885 = vpop.f32.mrf.mxu0
        %886 = vdwg.mxu0
        %v887 = vmul.f32 %v884, 0.5
        %v888 = vmul.f32 %v884, 0.70710677
        %vm889 = vcmp.ge.f32.partialorder %v888, 0.0
        %v890 = vsel %vm889, 1.0, -1.0
        %v891 = vand.u32 2147483647, %v888
        %v892 = vmul.f32 %v891, 0.3275911
        %v893 = vadd.f32 %v892, 1.0
        %v894 = vrcp.pop %v893
        %v895 = vmul.f32 %v893, %v894
        %v896 = vsub.f32 2.0, %v895
        %v897 = vmul.f32 %v894, %v896
        %v898 = vmul.f32 %v897, 1.0614054
        %v899 = vadd.f32 %v898, -1.4531521
        %v900 = vmul.f32 %v899, %v897
        %v901 = vadd.f32 %v900, 1.4214138
        %v902 = vmul.f32 %v901, %v897
        %v903 = vadd.f32 %v902, -0.28449672
        %v904 = vmul.f32 %v903, %v897
        %v905 = vadd.f32 %v904, 0.2548296
        %v906 = vmul.f32 %v905, %v897
        %v907 = vsub.f32 0.0, %v891
        %v908 = vmul.f32 %v907, %v891
        %v909 = vmul.f32 %v908, 1.442695
        %v910 = vpow.pop %v909
        %v911 = vmul.f32 %v906, %v910
        %v912 = vsub.f32 1.0, %v911
        %v913 = vmul.f32 %v890, %v912
        %v914 = vadd.f32 %v913, 1.0
        %v915 = vmul.f32 %v887, %v914
        %v916 = vpack.c.bf16 %v915, %v915
        %v917 = vld [vmem:[%s465] sm:$0xf]
        %v918 = vld [vmem:[%s465 + $0x4] sm:$0xf]
        %v919 = vld [vmem:[%s465 + $0x8] sm:$0xf]
        %v920 = vld [vmem:[%s465 + $0xc] sm:$0xf]
        %v921 = vld [vmem:[%s465 + $0x10] sm:$0xf]
        %v922 = vld [vmem:[%s465 + $0x14] sm:$0xf]
        %v923 = vld [vmem:[%s465 + $0x18] sm:$0xf]
        %v924 = vld [vmem:[%s465 + $0x1c] sm:$0xf]
        %v925 = vperm.slane %v484, 4
        %v934 = vunpack.c.l.b16 %v917
        %v935 = vunpack.c.l.b16 %v918
        %v936 = vunpack.c.l.b16 %v919
        %v937 = vunpack.c.l.b16 %v920
        %v938 = vunpack.c.l.b16 %v921
        %v939 = vunpack.c.l.b16 %v922
        %v940 = vunpack.c.l.b16 %v923
        %v941 = vunpack.c.l.b16 %v924
        %v942 = vpack.c.b16 %v935, %v934
        %v943 = vpack.c.b16 %v937, %v936
        %v944 = vpack.c.b16 %v939, %v938
        %v945 = vpack.c.b16 %v941, %v940
        %vm950 = vcmask 523264
        %v952 = vsel %vm950, %v916, 0
        %954 = vmatpush.bf16.msra.mxu0 0
        %955 = vmatpush.bf16.msra.mxu0 0
        %956 = vmatpush.bf16.msra.mxu0 0
        %957 = vmatpush.bf16.msra.mxu0 0
        %958 = vmatpush.bf16.msra.mxu0 %v945
        %959 = vmatpush.bf16.msra.mxu0 %v944
        %960 = vmatpush.bf16.msra.mxu0 %v943
        %961 = vmatpush.bf16.msra.mxu0 %v942
        %962 = vmatmul.bf16.gmra.mxu0 %v952
        %v963 = vpop.f32.mrf.mxu0
        %v964 = vadd.f32 %v925, %v963
        %v965 = vpop.f32.mrf.mxu0
        %966 = vdwg.mxu0
        %v967 = vadd.f32 %v964, %v850
        %v968 = vsel %vm524, %v967, 0.0
        %969 = vadd.xlane.f32.xlu0 %v968
        %v970 = vpop.xlane.xlu0 %969
        %v971 = vmul.f32 %v970, %v827
        %v972 = vsub.f32 %v967, %v971
        %v973 = vmul.f32 %v972, %v972
        %v974 = vsel %vm524, %v973, 0.0
        %975 = vadd.xlane.f32.xlu0 %v974
        %v976 = vpop.xlane.xlu0 %975
        %v977 = vmul.f32 %v976, %v827
        %v978 = vadd.f32 %v977, 1e-05
        %v979 = vrsqrt.pop %v978
        %v980 = vmul.f32 %v979, %v978
        %v981 = vmul.f32 %v980, %v979
        %v982 = vmul.f32 0.5, %v981
        %v983 = vsub.f32 1.5, %v982
        %v984 = vmul.f32 %v979, %v983
        %vm985 = vweird.f32 %v978
        %vm986 = vweird.f32 %v979
        %vm987 = vmor %vm985, %vm986
        %v988 = vsel %vm987, %v979, %v984
        %v989 = vmul.f32 %v972, %v988
        %v990 = vperm.slane %v484, 7
        %v991 = vmul.f32 %v989, %v990
        %v992 = vperm.slane %v485, 0
        %v993 = vadd.f32 %v991, %v992
        %994 = vst.msk [vmem:[%s436] sm:$0xff] %vm524, %v993
        %s995 = sand.u32 %s272, 1
        %s996 = scalar_lea.sflag [#allocation3], %s995
        %s997 = sand.u32 %s272, 1
        %s998 = smul.addr %s997, 8
        %s999 = scalar_lea.vmem [#allocation2], %s998
        // Predicated region
        $region61: #{tpu_custom_call.1} parent=55 // pred_check
          %p1000 = pneg %p282
        $region62: #{tpu_custom_call.1} parent=55 // pred_check_branch
          %1002 = sbr.rel (%p1000) target = $region64
        $region63: #{tpu_custom_call.1} parent=55 // pred_region
          %1004 = vsyncadd %s996, 0
          %s1005 = smul.addr %s27, 8
          %s1006 = scalar_lea.hbm %s9, %s1005
          %s1008 = sshll.u32 %s999, 4
          %s1009 = int_to_ptr.vmem [resolvable:$true] %s1008
          %s1010 = sshll.u32 %s1006, 4
          %s1011 = int_to_ptr.hbm [resolvable:$true] %s1010
          %1013 = dma.vmem_to_hbm [thread:$0]  %s1009, 128, %s1011, %s996
        $region64: #{tpu_custom_call.1} parent=55 // pred_fallthru
          _
      $region56: #{tpu_custom_call.1} parent=5 // pred_fallthru
        _
      %p1014 = scmp.le.s32.totalorder 2, %s18
      // Predicated region
      $region65: #{tpu_custom_call.1} parent=5 // pred_check
        %p1015 = pneg %p1014
      $region66: #{tpu_custom_call.1} parent=5 // pred_check_branch
        %1017 = sbr.rel (%p1015) target = $region68
      $region67: #{tpu_custom_call.1} parent=5 // pred_region
        %s1018 = ssub.s32 %s18, 2
        // Predicated region
        $region69: #{tpu_custom_call.1} parent=67 // pred_check
          %p1019 = pneg %p288
        $region70: #{tpu_custom_call.1} parent=67 // pred_check_branch
          %1021 = sbr.rel (%p1019) target = $region72
        $region71: #{tpu_custom_call.1} parent=67 // pred_region
          %s1022 = sand.u32 %s273, 1
          %s1023 = scalar_lea.sflag [#allocation3], %s1022
          %s1024 = sand.u32 %s273, 1
          %s1025 = smul.addr %s1024, 8
          %s1026 = scalar_lea.vmem [#allocation2], %s1025
          %1028 = dma.done %s1023, 128
        $region72: #{tpu_custom_call.1} parent=67 // pred_fallthru
          _
      $region68: #{tpu_custom_call.1} parent=5 // pred_fallthru
        _
    $region6: #{tpu_custom_call.1} parent=1 // loop_footer
      %s22 = sadd.s32 1, %s18
    $region7: #{tpu_custom_call.1} parent=1 // loop_footer_branch
      %17 = sbr.rel target = $region3
    $region8: #{tpu_custom_call.1} parent=1 // loop_exit
      _
    %1029 = vsyncpa [#allocation3], 1
    %s1030 = scalar_lea.sflag [#allocation3], 1
    %1031 = vsyncpa %s1030, 1

</llo_original>
